<compile_context>
chip_gen: v5e
topology: v5e:2x2
jax: 0.10.0
libtpu: 0.0.40
codegen_flags: <defaults>
</compile_context>

<pallas_src>
import functools

import jax
import jax.numpy as jnp
from jax import lax
from jax.experimental import pallas as pl
from jax.experimental.pallas import tpu as pltpu


# ---------------------------------------------------------------------------
# Encoder: z = adj @ act(adj @ x @ W1) @ W2   (single invocation, small output)
# ---------------------------------------------------------------------------
def _encoder_kernel(x_ref, adj_ref, w1_ref, w2_ref, z_ref, *,
                    xw_first_1, hw_first_2):
    x = x_ref[...]          # bf16 [N, Fp]
    adj = adj_ref[...]      # bf16 [N, N]

    # ---- layer 1: relu(adj @ x @ W1), association chosen so the N^2 matmul
    #      contracts over min(Fp, H1p).
    if xw_first_1:
        t = jnp.dot(x, w1_ref[...], preferred_element_type=jnp.float32)
        h = jnp.dot(adj, t.astype(jnp.bfloat16),
                    preferred_element_type=jnp.float32)
    else:
        t = jnp.dot(adj, x, preferred_element_type=jnp.float32)
        h = jnp.dot(t.astype(jnp.bfloat16), w1_ref[...],
                    preferred_element_type=jnp.float32)
    h = jnp.maximum(h, 0.0).astype(jnp.bfloat16)

    # ---- layer 2 (identity activation)
    if hw_first_2:
        t2 = jnp.dot(h, w2_ref[...], preferred_element_type=jnp.float32)
        z = jnp.dot(adj, t2.astype(jnp.bfloat16),
                    preferred_element_type=jnp.float32)
    else:
        t2 = jnp.dot(adj, h, preferred_element_type=jnp.float32)
        z = jnp.dot(t2.astype(jnp.bfloat16), w2_ref[...],
                    preferred_element_type=jnp.float32)

    z_ref[...] = z          # f32 [N, H2p] (lane-dense: H2p multiple of 128)


# ---------------------------------------------------------------------------
# Decoder + loss + accuracy, tiled over the (i, j) grid of the N x N logits.
# Partial sums per row-tile i, accumulated across j (arbitrary, innermost).
# ---------------------------------------------------------------------------
def _decoder_kernel(zr_ref, zc_ref, lab_ref, loss_ref, corr_ref, *, pos_weight):
    j = pl.program_id(1)

    @pl.when(j == 0)
    def _():
        loss_ref[...] = jnp.zeros_like(loss_ref)
        corr_ref[...] = jnp.zeros_like(corr_ref)

    # logits tile = z_rows @ z_cols^T, contracting dim 1 directly (no transpose)
    logits = lax.dot_general(
        zr_ref[...], zc_ref[...],
        dimension_numbers=(((1,), (1,)), ((), ())),
        preferred_element_type=jnp.float32)          # [TM, TN] f32

    y = lab_ref[...].astype(jnp.float32)             # int8 0/1 -> f32

    # BCEWithLogits(pos_weight), numerically stable:
    #   softplus(-x) = max(-x, 0) + log1p(exp(-|x|))
    #   loss = (1-y)*x + (1 + (pw-1)*y) * softplus(-x)
    sp_neg = jnp.maximum(-logits, 0.0) + jnp.log1p(jnp.exp(-jnp.abs(logits)))
    loss = (1.0 - y) * logits + (1.0 + (pos_weight - 1.0) * y) * sp_neg
    loss_ref[...] = loss_ref[...] + jnp.sum(loss)

    # accuracy: sigmoid(x) >= 0.5  <=>  x >= 0  (no exp needed)
    pred_pos = logits >= 0.0
    label_pos = y >= 0.5
    correct = (pred_pos == label_pos).astype(jnp.float32)
    corr_ref[...] = corr_ref[...] + jnp.sum(correct)


# ---------------------------------------------------------------------------
# Wrapper
# ---------------------------------------------------------------------------
def _round_up(x, m):
    return ((x + m - 1) // m) * m


def _pick_tile(n):
    # biggest tile (multiple of 128) that divides n; fall back to full extent.
    for t in (512, 256, 128):
        if n % t == 0:
            return t
    return n   # TODO(synk): ragged N would need masked tiles; full-extent fallback.


def gcn_model_ae_forward(features, adj, w1, w2, labels_dense, pos_weight):
    """Returns (cost, accuracy, z_mean) like GCNModelAE.forward (eval mode)."""
    n, f = features.shape
    h1 = w1.shape[1]
    h2 = w2.shape[1]

    # Zero-pad feature/hidden dims to 128 lanes (exact: zero padding does not
    # change any matmul / relu result).
    fp = _round_up(f, 128)
    h1p = _round_up(h1, 128)
    h2p = _round_up(h2, 128)

    x_p = jnp.pad(features, ((0, 0), (0, fp - f))).astype(jnp.bfloat16)
    adj_b = adj.astype(jnp.bfloat16)
    w1_p = jnp.pad(w1, ((0, fp - f), (0, h1p - h1))).astype(jnp.bfloat16)
    w2_p = jnp.pad(w2, ((0, h1p - h1), (0, h2p - h2))).astype(jnp.bfloat16)

    # Association: keep the N^2-sized matmul's contraction dim minimal.
    xw_first_1 = h1p <= fp     # adj @ (x @ W1)  vs  (adj @ x) @ W1
    hw_first_2 = h2p <= h1p    # adj @ (h @ W2)  vs  (adj @ h) @ W2

    # ---- encoder call ----
    z_pad = pl.pallas_call(
        functools.partial(_encoder_kernel,
                          xw_first_1=xw_first_1, hw_first_2=hw_first_2),
        out_shape=jax.ShapeDtypeStruct((n, h2p), jnp.float32),
        in_specs=[
            pl.BlockSpec(memory_space=pltpu.VMEM),  # x (bf16, padded)
            pl.BlockSpec(memory_space=pltpu.VMEM),  # adj (bf16)
            pl.BlockSpec(memory_space=pltpu.VMEM),  # W1 (bf16, padded)
            pl.BlockSpec(memory_space=pltpu.VMEM),  # W2 (bf16, padded)
        ],
        out_specs=pl.BlockSpec(memory_space=pltpu.VMEM),
        compiler_params=pltpu.CompilerParams(
            vmem_limit_bytes=48 * 1024 * 1024),
    )(x_p, adj_b, w1_p, w2_p)

    # ---- decoder / loss / accuracy call (tiled, streaming int8 labels) ----
    labels_i8 = labels_dense.astype(jnp.int8)
    tm = _pick_tile(n)
    tn = _pick_tile(n)
    num_i = n // tm
    num_j = n // tn

    loss_part, corr_part = pl.pallas_call(
        functools.partial(_decoder_kernel, pos_weight=float(pos_weight)),
        grid=(num_i, num_j),
        out_shape=(
            jax.ShapeDtypeStruct((num_i, 1, 1), jnp.float32),  # sum(loss) per row-tile
            jax.ShapeDtypeStruct((num_i, 1, 1), jnp.float32),  # sum(correct) per row-tile
        ),
        in_specs=[
            pl.BlockSpec((tm, h2p), lambda i, j: (i, 0)),  # z row tile
            pl.BlockSpec((tn, h2p), lambda i, j: (j, 0)),  # z col tile
            pl.BlockSpec((tm, tn), lambda i, j: (i, j)),   # labels tile (int8)
        ],
        out_specs=(
            pl.BlockSpec((1, 1, 1), lambda i, j: (i, 0, 0)),
            pl.BlockSpec((1, 1, 1), lambda i, j: (i, 0, 0)),
        ),
        compiler_params=pltpu.CompilerParams(
            dimension_semantics=("parallel", "arbitrary"),
            vmem_limit_bytes=32 * 1024 * 1024),
    )(z_pad, z_pad, labels_i8)

    inv_count = 1.0 / float(n * n)
    cost = jnp.sum(loss_part) * inv_count
    accuracy = jnp.sum(corr_part) * inv_count
    return cost, accuracy, z_pad[:, :h2]


# ---------------------------------------------------------------------------
# Pure-JAX reference (f32 end-to-end) for a correctness sanity check.
# ---------------------------------------------------------------------------
def _reference(features, adj, w1, w2, labels, pos_weight):
    h = jnp.maximum(adj @ (features @ w1), 0.0)
    z = adj @ (h @ w2)
    logits = z @ z.T
    y = labels.astype(jnp.float32)
    sp_neg = jnp.maximum(-logits, 0.0) + jnp.log1p(jnp.exp(-jnp.abs(logits)))
    loss = (1.0 - y) * logits + (1.0 + (pos_weight - 1.0) * y) * sp_neg
    cost = jnp.mean(loss)
    acc = jnp.mean(((logits >= 0.0) == (y >= 0.5)).astype(jnp.float32))
    return cost, acc, z


def _glorot(key, shape):
    limit = jnp.sqrt(6.0 / (shape[0] + shape[1]))
    return jax.random.uniform(key, shape, jnp.float32, minval=-limit, maxval=limit)


if __name__ == "__main__":
    # Small synthetic problem: N nodes, F input features, hidden1, hidden2.
    # N=384 gives a real 3x3 decoder grid with 128x128 tiles.
    N, F, H1, H2 = 384, 64, 32, 16

    key = jax.random.PRNGKey(0)
    k_feat, k_adj, k_w1, k_w2 = jax.random.split(key, 4)

    # Dense stand-in for the sparse feature matrix.
    features = (jax.random.uniform(k_feat, (N, F)) < 0.3).astype(jnp.float32)

    # Symmetric 0/1 adjacency with self-loops, then symmetric normalization.
    a = (jax.random.uniform(k_adj, (N, N)) < 0.05).astype(jnp.float32)
    a = jnp.maximum(a, a.T)
    a = jnp.maximum(a, jnp.eye(N, dtype=jnp.float32))
    deg = jnp.sum(a, axis=1)
    d_inv_sqrt = 1.0 / jnp.sqrt(deg)
    adj_norm = a * d_inv_sqrt[:, None] * d_inv_sqrt[None, :]

    # Labels: dense reconstruction target (original adjacency), 0/1.
    labels_dense = a

    # Glorot-initialized weights (shapes from module __init__).
    w1 = _glorot(k_w1, (F, H1))
    w2 = _glorot(k_w2, (H1, H2))

    # pos_weight = (#zeros / #ones), standard GAE setup.
    n_ones = jnp.sum(a)
    pos_weight = float((N * N - n_ones) / n_ones)

    cost, accuracy, z_mean = gcn_model_ae_forward(
        features, adj_norm, w1, w2, labels_dense, pos_weight)
    jax.block_until_ready((cost, accuracy, z_mean))

    # Sanity check against the f32 reference (bf16 MXU inputs -> loose tol).
    ref_cost, ref_acc, ref_z = _reference(
        features, adj_norm, w1, w2, labels_dense, pos_weight)
    jax.block_until_ready((ref_cost, ref_acc, ref_z))

    assert z_mean.shape == (N, H2)
    assert cost.shape == () and accuracy.shape == ()
    assert abs(float(cost) - float(ref_cost)) <= 0.05 * abs(float(ref_cost)) + 1e-3, \
        (float(cost), float(ref_cost))
    assert abs(float(accuracy) - float(ref_acc)) <= 0.03, \
        (float(accuracy), float(ref_acc))
    assert bool(jnp.allclose(z_mean, ref_z, rtol=0.05, atol=0.05))

    print("KERNEL_OK")
</pallas_src>

<mosaic_0001>
module attributes {stable_mosaic.version = 11 : i64} {
  func.func @_encoder_kernel(%arg0: memref<384x128xbf16, #tpu.memory_space<vmem>>, %arg1: memref<384x384xbf16, #tpu.memory_space<vmem>>, %arg2: memref<128x128xbf16, #tpu.memory_space<vmem>>, %arg3: memref<128x128xbf16, #tpu.memory_space<vmem>>, %arg4: memref<384x128xf32, #tpu.memory_space<vmem>>) attributes {dimension_semantics = [], scalar_prefetch = 0 : i64, scratch_operands = 0 : i64, tpu.core_type = #tpu.core_type<tc>} {
    %c0 = arith.constant 0 : index
    %c0_0 = arith.constant 0 : index
    %0 = vector.load %arg0[%c0, %c0_0] : memref<384x128xbf16, #tpu.memory_space<vmem>>, vector<384x128xbf16>
    %c0_1 = arith.constant 0 : index
    %c0_2 = arith.constant 0 : index
    %1 = vector.load %arg1[%c0_1, %c0_2] : memref<384x384xbf16, #tpu.memory_space<vmem>>, vector<384x384xbf16>
    %c0_3 = arith.constant 0 : index
    %c0_4 = arith.constant 0 : index
    %2 = vector.load %arg2[%c0_3, %c0_4] : memref<128x128xbf16, #tpu.memory_space<vmem>>, vector<128x128xbf16>
    %cst = arith.constant dense<0.000000e+00> : vector<384x128xf32>
    %3 = tpu.matmul %0, %2, %cst {dimension_numbers = #tpu.dot_dimension_numbers<[1], [0], [0], [1], [0, 0, 1, 1], [], []>} : vector<384x128xbf16>, vector<128x128xbf16>, vector<384x128xf32> -> vector<384x128xf32>
    %4 = arith.truncf %3 : vector<384x128xf32> to vector<384x128xbf16>
    %cst_5 = arith.constant dense<0.000000e+00> : vector<384x128xf32>
    %5 = tpu.matmul %1, %4, %cst_5 {dimension_numbers = #tpu.dot_dimension_numbers<[1], [0], [0], [1], [0, 0, 1, 1], [], []>} : vector<384x384xbf16>, vector<384x128xbf16>, vector<384x128xf32> -> vector<384x128xf32>
    %cst_6 = arith.constant 0.000000e+00 : f32
    %6 = vector.broadcast %cst_6 : f32 to vector<384x128xf32>
    %7 = arith.maximumf %5, %6 : vector<384x128xf32>
    %8 = arith.truncf %7 : vector<384x128xf32> to vector<384x128xbf16>
    %c0_7 = arith.constant 0 : index
    %c0_8 = arith.constant 0 : index
    %9 = vector.load %arg3[%c0_7, %c0_8] : memref<128x128xbf16, #tpu.memory_space<vmem>>, vector<128x128xbf16>
    %cst_9 = arith.constant dense<0.000000e+00> : vector<384x128xf32>
    %10 = tpu.matmul %8, %9, %cst_9 {dimension_numbers = #tpu.dot_dimension_numbers<[1], [0], [0], [1], [0, 0, 1, 1], [], []>} : vector<384x128xbf16>, vector<128x128xbf16>, vector<384x128xf32> -> vector<384x128xf32>
    %11 = arith.truncf %10 : vector<384x128xf32> to vector<384x128xbf16>
    %cst_10 = arith.constant dense<0.000000e+00> : vector<384x128xf32>
    %12 = tpu.matmul %1, %11, %cst_10 {dimension_numbers = #tpu.dot_dimension_numbers<[1], [0], [0], [1], [0, 0, 1, 1], [], []>} : vector<384x384xbf16>, vector<384x128xbf16>, vector<384x128xf32> -> vector<384x128xf32>
    %c0_11 = arith.constant 0 : index
    %c0_12 = arith.constant 0 : index
    %13 = vector.load %arg4[%c0_11, %c0_12] : memref<384x128xf32, #tpu.memory_space<vmem>>, vector<384x128xf32>
    tpu.vector_store %arg4[%c0_11, %c0_12], %12 {strides = array<i32>} : memref<384x128xf32, #tpu.memory_space<vmem>>, vector<384x128xf32>,
    return
  }
}

</mosaic_0001>

<llo_original>
// kernel: tpu_custom_call.1
$region0: #{tpu_custom_call.1}
  #allocation0 [shape = 'u32[]', space=smem, size = 0x4, offset = 0x4, fixed_abs, tag = 'smem constant byte address 0x4 - core index']
  #allocation1 [shape = 'u32[72,128]{1,0:T(1,128)}', space=vmem, size = 0x9000, scoped, tag = 'internal scratch']
  %s0 = inlined_call_operand.hbm [shape: bf16[384,128], index: 0, kind: input, shape index: {}]
  %s1 = inlined_call_operand.hbm [shape: bf16[384,384], index: 1, kind: input, shape index: {}]
  %s2 = inlined_call_operand.hbm [shape: bf16[128,128], index: 2, kind: input, shape index: {}]
  %s3 = inlined_call_operand.hbm [shape: bf16[128,128], index: 3, kind: input, shape index: {}]
  %s4 = inlined_call_operand.hbm [shape: f32[384,128], index: 4, kind: output, shape index: {}]
  %s5 = sld [smem:[#allocation0]]
  $region42: #{tpu_custom_call.1} parent=0
    _
  %s7 = ssub.s32 1, %s5
  %s8 = scalar_select 0, %s7, %s5
  $region1: #{tpu_custom_call.1} parent=0
    #allocation2 [shape = 'u8[98304]{0}', space=vmem, size = 0x18000, scoped, tag = 'input window, operand 0, single buffered']
    #allocation3 [shape = 's32[1]{0}', space=sflag, size = 0x4, scoped, tag = 'scoped memory for tpu_custom_call.1']
    #allocation4 [shape = 's32[1]{0}', space=sflag, size = 0x4, scoped, tag = 'scoped memory for tpu_custom_call.1']
    #allocation5 [shape = 'u8[294912]{0}', space=vmem, size = 0x48000, scoped, tag = 'input window, operand 1, single buffered']
    #allocation6 [shape = 's32[1]{0}', space=sflag, size = 0x4, scoped, tag = 'scoped memory for tpu_custom_call.1']
    #allocation7 [shape = 'u8[32768]{0}', space=vmem, size = 0x8000, scoped, tag = 'input window, operand 2, single buffered']
    #allocation8 [shape = 'u8[32768]{0}', space=vmem, size = 0x8000, scoped, tag = 'input window, operand 3, single buffered']
    #allocation9 [shape = 's32[1]{0}', space=sflag, size = 0x4, scoped, tag = 'scoped memory for tpu_custom_call.1']
    #allocation10 [shape = 'u8[196608]{0}', space=vmem, size = 0x30000, scoped, tag = 'output window, operand 0, single buffered']
    %9 = vsyncpa [#allocation3], 0
    %10 = vsyncpa [#allocation6], 0
    %11 = vsyncpa [#allocation9], 0
    %12 = vsyncpa [#allocation4], 0
    // Predicated region
    $region2: #{tpu_custom_call.1} parent=1 // pred_check
      _
    $region3: #{tpu_custom_call.1} parent=1 // pred_check_branch
      %14 = sbr.rel (0) target = $region5
    $region4: #{tpu_custom_call.1} parent=1 // pred_region
      %16 = vsyncadd [#allocation3], 0
      %s17 = sshll.u32 %s0, 4
      %s18 = int_to_ptr.hbm [resolvable:$true] %s17
      %s19 = sshll.u32 [#allocation2], 4
      %s20 = int_to_ptr.vmem [resolvable:$true] %s19
      %25 = dma.hbm_to_vmem [thread:$0]  %s18, 3072, %s20, [#allocation3], 64, 64, 4
    $region5: #{tpu_custom_call.1} parent=1 // pred_fallthru
      _
    // Predicated region
    $region6: #{tpu_custom_call.1} parent=1 // pred_check
      _
    $region7: #{tpu_custom_call.1} parent=1 // pred_check_branch
      %27 = sbr.rel (0) target = $region9
    $region8: #{tpu_custom_call.1} parent=1 // pred_region
      %29 = vsyncadd [#allocation6], 0
      %s30 = sshll.u32 %s1, 4
      %s31 = int_to_ptr.hbm [resolvable:$true] %s30
      %s32 = sshll.u32 [#allocation5], 4
      %s33 = int_to_ptr.vmem [resolvable:$true] %s32
      %38 = dma.hbm_to_vmem [thread:$0]  %s31, 9216, %s33, [#allocation6], 192, 192, 12
    $region9: #{tpu_custom_call.1} parent=1 // pred_fallthru
      _
    // Predicated region
    $region10: #{tpu_custom_call.1} parent=1 // pred_check
      _
    $region11: #{tpu_custom_call.1} parent=1 // pred_check_branch
      %40 = sbr.rel (0) target = $region13
    $region12: #{tpu_custom_call.1} parent=1 // pred_region
      %42 = vsyncadd [#allocation6], 0
      %s43 = sshll.u32 %s2, 4
      %s44 = int_to_ptr.hbm [resolvable:$true] %s43
      %s45 = sshll.u32 [#allocation7], 4
      %s46 = int_to_ptr.vmem [resolvable:$true] %s45
      %51 = dma.hbm_to_vmem [thread:$0]  %s44, 1024, %s46, [#allocation6], 64, 64, 4
    $region13: #{tpu_custom_call.1} parent=1 // pred_fallthru
      _
    // Predicated region
    $region14: #{tpu_custom_call.1} parent=1 // pred_check
      _
    $region15: #{tpu_custom_call.1} parent=1 // pred_check_branch
      %53 = sbr.rel (0) target = $region17
    $region16: #{tpu_custom_call.1} parent=1 // pred_region
      %55 = vsyncadd [#allocation9], 0
      %s56 = sshll.u32 %s3, 4
      %s57 = int_to_ptr.hbm [resolvable:$true] %s56
      %s58 = sshll.u32 [#allocation8], 4
      %s59 = int_to_ptr.vmem [resolvable:$true] %s58
      %64 = dma.hbm_to_vmem [thread:$0]  %s57, 1024, %s59, [#allocation9], 64, 64, 4
    $region17: #{tpu_custom_call.1} parent=1 // pred_fallthru
      _
    // Predicated region
    $region18: #{tpu_custom_call.1} parent=1 // pred_check
      _
    $region19: #{tpu_custom_call.1} parent=1 // pred_check_branch
      %66 = sbr.rel (0) target = $region21
    $region20: #{tpu_custom_call.1} parent=1 // pred_region
      %68 = dma.done [#allocation3], 3072
    $region21: #{tpu_custom_call.1} parent=1 // pred_fallthru
      _
    // Predicated region
    $region22: #{tpu_custom_call.1} parent=1 // pred_check
      _
    $region23: #{tpu_custom_call.1} parent=1 // pred_check_branch
      %70 = sbr.rel (0) target = $region25
    $region24: #{tpu_custom_call.1} parent=1 // pred_region
      %72 = dma.done [#allocation6], 9216
    $region25: #{tpu_custom_call.1} parent=1 // pred_fallthru
      _
    // Predicated region
    $region26: #{tpu_custom_call.1} parent=1 // pred_check
      _
    $region27: #{tpu_custom_call.1} parent=1 // pred_check_branch
      %74 = sbr.rel (0) target = $region29
    $region28: #{tpu_custom_call.1} parent=1 // pred_region
      %76 = dma.done [#allocation6], 1024
    $region29: #{tpu_custom_call.1} parent=1 // pred_fallthru
      _
    // Predicated region
    $region30: #{tpu_custom_call.1} parent=1 // pred_check
      _
    $region31: #{tpu_custom_call.1} parent=1 // pred_check_branch
      %78 = sbr.rel (0) target = $region33
    $region32: #{tpu_custom_call.1} parent=1 // pred_region
      %80 = dma.done [#allocation9], 1024
    $region33: #{tpu_custom_call.1} parent=1 // pred_fallthru
      _
    %v81 = vld [vmem:[#allocation2] sm:$0xf]
    %v82 = vld [vmem:[#allocation2 + $0x4] sm:$0xf]
    %v83 = vld [vmem:[#allocation2 + $0x8] sm:$0xf]
    %v84 = vld [vmem:[#allocation2 + $0xc] sm:$0xf]
    %v85 = vld [vmem:[#allocation2 + $0x10] sm:$0xf]
    %v86 = vld [vmem:[#allocation2 + $0x14] sm:$0xf]
    %v87 = vld [vmem:[#allocation2 + $0x18] sm:$0xf]
    %v88 = vld [vmem:[#allocation2 + $0x1c] sm:$0xf]
    %v89 = vld [vmem:[#allocation2 + $0x20] sm:$0xf]
    %v90 = vld [vmem:[#allocation2 + $0x24] sm:$0xf]
    %v91 = vld [vmem:[#allocation2 + $0x28] sm:$0xf]
    %v92 = vld [vmem:[#allocation2 + $0x2c] sm:$0xf]
    %v93 = vld [vmem:[#allocation2 + $0x30] sm:$0xf]
    %v94 = vld [vmem:[#allocation2 + $0x34] sm:$0xf]
    %v95 = vld [vmem:[#allocation2 + $0x38] sm:$0xf]
    %v96 = vld [vmem:[#allocation2 + $0x3c] sm:$0xf]
    %v97 = vld [vmem:[#allocation2 + $0x40] sm:$0xf]
    %v98 = vld [vmem:[#allocation2 + $0x44] sm:$0xf]
    %v99 = vld [vmem:[#allocation2 + $0x48] sm:$0xf]
    %v100 = vld [vmem:[#allocation2 + $0x4c] sm:$0xf]
    %v101 = vld [vmem:[#allocation2 + $0x50] sm:$0xf]
    %v102 = vld [vmem:[#allocation2 + $0x54] sm:$0xf]
    %v103 = vld [vmem:[#allocation2 + $0x58] sm:$0xf]
    %v104 = vld [vmem:[#allocation2 + $0x5c] sm:$0xf]
    %v105 = vld [vmem:[#allocation2 + $0x60] sm:$0xf]
    %v106 = vld [vmem:[#allocation2 + $0x64] sm:$0xf]
    %v107 = vld [vmem:[#allocation2 + $0x68] sm:$0xf]
    %v108 = vld [vmem:[#allocation2 + $0x6c] sm:$0xf]
    %v109 = vld [vmem:[#allocation2 + $0x70] sm:$0xf]
    %v110 = vld [vmem:[#allocation2 + $0x74] sm:$0xf]
    %v111 = vld [vmem:[#allocation2 + $0x78] sm:$0xf]
    %v112 = vld [vmem:[#allocation2 + $0x7c] sm:$0xf]
    %v113 = vld [vmem:[#allocation2 + $0x80] sm:$0xf]
    %v114 = vld [vmem:[#allocation2 + $0x84] sm:$0xf]
    %v115 = vld [vmem:[#allocation2 + $0x88] sm:$0xf]
    %v116 = vld [vmem:[#allocation2 + $0x8c] sm:$0xf]
    %v117 = vld [vmem:[#allocation2 + $0x90] sm:$0xf]
    %v118 = vld [vmem:[#allocation2 + $0x94] sm:$0xf]
    %v119 = vld [vmem:[#allocation2 + $0x98] sm:$0xf]
    %v120 = vld [vmem:[#allocation2 + $0x9c] sm:$0xf]
    %v121 = vld [vmem:[#allocation2 + $0xa0] sm:$0xf]
    %v122 = vld [vmem:[#allocation2 + $0xa4] sm:$0xf]
    %v123 = vld [vmem:[#allocation2 + $0xa8] sm:$0xf]
    %v124 = vld [vmem:[#allocation2 + $0xac] sm:$0xf]
    %v125 = vld [vmem:[#allocation2 + $0xb0] sm:$0xf]
    %v126 = vld [vmem:[#allocation2 + $0xb4] sm:$0xf]
    %v127 = vld [vmem:[#allocation2 + $0xb8] sm:$0xf]
    %v128 = vld [vmem:[#allocation2 + $0xbc] sm:$0xf]
    %v129 = vld [vmem:[#allocation5] sm:$0xff]
    %v130 = vld [vmem:[#allocation5 + $0x8] sm:$0xf]
    %v131 = vld [vmem:[#allocation5 + $0xc] sm:$0xff]
    %v132 = vld [vmem:[#allocation5 + $0x14] sm:$0xf]
    %v133 = vld [vmem:[#allocation5 + $0x18] sm:$0xff]
    %v134 = vld [vmem:[#allocation5 + $0x20] sm:$0xf]
    %v135 = vld [vmem:[#allocation5 + $0x24] sm:$0xff]
    %v136 = vld [vmem:[#allocation5 + $0x2c] sm:$0xf]
    %v137 = vld [vmem:[#allocation5 + $0x30] sm:$0xff]
    %v138 = vld [vmem:[#allocation5 + $0x38] sm:$0xf]
    %v139 = vld [vmem:[#allocation5 + $0x3c] sm:$0xff]
    %v140 = vld [vmem:[#allocation5 + $0x44] sm:$0xf]
    %v141 = vld [vmem:[#allocation5 + $0x48] sm:$0xff]
    %v142 = vld [vmem:[#allocation5 + $0x50] sm:$0xf]
    %v143 = vld [vmem:[#allocation5 + $0x54] sm:$0xff]
    %v144 = vld [vmem:[#allocation5 + $0x5c] sm:$0xf]
    %v145 = vld [vmem:[#allocation5 + $0x60] sm:$0xff]
    %v146 = vld [vmem:[#allocation5 + $0x68] sm:$0xf]
    %v147 = vld [vmem:[#allocation5 + $0x6c] sm:$0xff]
    %v148 = vld [vmem:[#allocation5 + $0x74] sm:$0xf]
    %v149 = vld [vmem:[#allocation5 + $0x78] sm:$0xff]
    %v150 = vld [vmem:[#allocation5 + $0x80] sm:$0xf]
    %v151 = vld [vmem:[#allocation5 + $0x84] sm:$0xff]
    %v152 = vld [vmem:[#allocation5 + $0x8c] sm:$0xf]
    %v153 = vld [vmem:[#allocation5 + $0x90] sm:$0xff]
    %v154 = vld [vmem:[#allocation5 + $0x98] sm:$0xf]
    %v155 = vld [vmem:[#allocation5 + $0x9c] sm:$0xff]
    %v156 = vld [vmem:[#allocation5 + $0xa4] sm:$0xf]
    %v157 = vld [vmem:[#allocation5 + $0xa8] sm:$0xff]
    %v158 = vld [vmem:[#allocation5 + $0xb0] sm:$0xf]
    %v159 = vld [vmem:[#allocation5 + $0xb4] sm:$0xff]
    %v160 = vld [vmem:[#allocation5 + $0xbc] sm:$0xf]
    %v161 = vld [vmem:[#allocation5 + $0xc0] sm:$0xff]
    %v162 = vld [vmem:[#allocation5 + $0xc8] sm:$0xf]
    %v163 = vld [vmem:[#allocation5 + $0xcc] sm:$0xff]
    %v164 = vld [vmem:[#allocation5 + $0xd4] sm:$0xf]
    %v165 = vld [vmem:[#allocation5 + $0xd8] sm:$0xff]
    %v166 = vld [vmem:[#allocation5 + $0xe0] sm:$0xf]
    %v167 = vld [vmem:[#allocation5 + $0xe4] sm:$0xff]
    %v168 = vld [vmem:[#allocation5 + $0xec] sm:$0xf]
    %v169 = vld [vmem:[#allocation5 + $0xf0] sm:$0xff]
    %v170 = vld [vmem:[#allocation5 + $0xf8] sm:$0xf]
    %v171 = vld [vmem:[#allocation5 + $0xfc] sm:$0xff]
    %v172 = vld [vmem:[#allocation5 + $0x104] sm:$0xf]
    %v173 = vld [vmem:[#allocation5 + $0x108] sm:$0xff]
    %v174 = vld [vmem:[#allocation5 + $0x110] sm:$0xf]
    %v175 = vld [vmem:[#allocation5 + $0x114] sm:$0xff]
    %v176 = vld [vmem:[#allocation5 + $0x11c] sm:$0xf]
    %v177 = vld [vmem:[#allocation5 + $0x120] sm:$0xff]
    %v178 = vld [vmem:[#allocation5 + $0x128] sm:$0xf]
    %v179 = vld [vmem:[#allocation5 + $0x12c] sm:$0xff]
    %v180 = vld [vmem:[#allocation5 + $0x134] sm:$0xf]
    %v181 = vld [vmem:[#allocation5 + $0x138] sm:$0xff]
    %v182 = vld [vmem:[#allocation5 + $0x140] sm:$0xf]
    %v183 = vld [vmem:[#allocation5 + $0x144] sm:$0xff]
    %v184 = vld [vmem:[#allocation5 + $0x14c] sm:$0xf]
    %v185 = vld [vmem:[#allocation5 + $0x150] sm:$0xff]
    %v186 = vld [vmem:[#allocation5 + $0x158] sm:$0xf]
    %v187 = vld [vmem:[#allocation5 + $0x15c] sm:$0xff]
    %v188 = vld [vmem:[#allocation5 + $0x164] sm:$0xf]
    %v189 = vld [vmem:[#allocation5 + $0x168] sm:$0xff]
    %v190 = vld [vmem:[#allocation5 + $0x170] sm:$0xf]
    %v191 = vld [vmem:[#allocation5 + $0x174] sm:$0xff]
    %v192 = vld [vmem:[#allocation5 + $0x17c] sm:$0xf]
    %v193 = vld [vmem:[#allocation5 + $0x180] sm:$0xff]
    %v194 = vld [vmem:[#allocation5 + $0x188] sm:$0xf]
    %v195 = vld [vmem:[#allocation5 + $0x18c] sm:$0xff]
    %v196 = vld [vmem:[#allocation5 + $0x194] sm:$0xf]
    %v197 = vld [vmem:[#allocation5 + $0x198] sm:$0xff]
    %v198 = vld [vmem:[#allocation5 + $0x1a0] sm:$0xf]
    %v199 = vld [vmem:[#allocation5 + $0x1a4] sm:$0xff]
    %v200 = vld [vmem:[#allocation5 + $0x1ac] sm:$0xf]
    %v201 = vld [vmem:[#allocation5 + $0x1b0] sm:$0xff]
    %v202 = vld [vmem:[#allocation5 + $0x1b8] sm:$0xf]
    %v203 = vld [vmem:[#allocation5 + $0x1bc] sm:$0xff]
    %v204 = vld [vmem:[#allocation5 + $0x1c4] sm:$0xf]
    %v205 = vld [vmem:[#allocation5 + $0x1c8] sm:$0xff]
    %v206 = vld [vmem:[#allocation5 + $0x1d0] sm:$0xf]
    %v207 = vld [vmem:[#allocation5 + $0x1d4] sm:$0xff]
    %v208 = vld [vmem:[#allocation5 + $0x1dc] sm:$0xf]
    %v209 = vld [vmem:[#allocation5 + $0x1e0] sm:$0xff]
    %v210 = vld [vmem:[#allocation5 + $0x1e8] sm:$0xf]
    %v211 = vld [vmem:[#allocation5 + $0x1ec] sm:$0xff]
    %v212 = vld [vmem:[#allocation5 + $0x1f4] sm:$0xf]
    %v213 = vld [vmem:[#allocation5 + $0x1f8] sm:$0xff]
    %v214 = vld [vmem:[#allocation5 + $0x200] sm:$0xf]
    %v215 = vld [vmem:[#allocation5 + $0x204] sm:$0xff]
    %v216 = vld [vmem:[#allocation5 + $0x20c] sm:$0xf]
    %v217 = vld [vmem:[#allocation5 + $0x210] sm:$0xff]
    %v218 = vld [vmem:[#allocation5 + $0x218] sm:$0xf]
    %v219 = vld [vmem:[#allocation5 + $0x21c] sm:$0xff]
    %v220 = vld [vmem:[#allocation5 + $0x224] sm:$0xf]
    %v221 = vld [vmem:[#allocation5 + $0x228] sm:$0xff]
    %v222 = vld [vmem:[#allocation5 + $0x230] sm:$0xf]
    %v223 = vld [vmem:[#allocation5 + $0x234] sm:$0xff]
    %v224 = vld [vmem:[#allocation5 + $0x23c] sm:$0xf]
    %v225 = vld [vmem:[#allocation7] sm:$0xf]
    %v226 = vld [vmem:[#allocation7 + $0x4] sm:$0xf]
    %v227 = vld [vmem:[#allocation7 + $0x8] sm:$0xf]
    %v228 = vld [vmem:[#allocation7 + $0xc] sm:$0xf]
    %v229 = vld [vmem:[#allocation7 + $0x10] sm:$0xf]
    %v230 = vld [vmem:[#allocation7 + $0x14] sm:$0xf]
    %v231 = vld [vmem:[#allocation7 + $0x18] sm:$0xf]
    %v232 = vld [vmem:[#allocation7 + $0x1c] sm:$0xf]
    %v233 = vld [vmem:[#allocation7 + $0x20] sm:$0xf]
    %v234 = vld [vmem:[#allocation7 + $0x24] sm:$0xf]
    %v235 = vld [vmem:[#allocation7 + $0x28] sm:$0xf]
    %v236 = vld [vmem:[#allocation7 + $0x2c] sm:$0xf]
    %v237 = vld [vmem:[#allocation7 + $0x30] sm:$0xf]
    %v238 = vld [vmem:[#allocation7 + $0x34] sm:$0xf]
    %v239 = vld [vmem:[#allocation7 + $0x38] sm:$0xf]
    %v240 = vld [vmem:[#allocation7 + $0x3c] sm:$0xf]
    %v289 = vunpack.c.l.b16 %v81
    %v290 = vunpack.c.l.b16 %v82
    %v291 = vunpack.c.l.b16 %v83
    %v292 = vunpack.c.l.b16 %v84
    %v293 = vunpack.c.l.b16 %v85
    %v294 = vunpack.c.l.b16 %v86
    %v295 = vunpack.c.l.b16 %v87
    %v296 = vunpack.c.l.b16 %v88
    %v297 = vunpack.c.l.b16 %v89
    %v298 = vunpack.c.l.b16 %v90
    %v299 = vunpack.c.l.b16 %v91
    %v300 = vunpack.c.l.b16 %v92
    %v301 = vunpack.c.l.b16 %v93
    %v302 = vunpack.c.l.b16 %v94
    %v303 = vunpack.c.l.b16 %v95
    %v304 = vunpack.c.l.b16 %v96
    %v305 = vunpack.c.l.b16 %v97
    %v306 = vunpack.c.l.b16 %v98
    %v307 = vunpack.c.l.b16 %v99
    %v308 = vunpack.c.l.b16 %v100
    %v309 = vunpack.c.l.b16 %v101
    %v310 = vunpack.c.l.b16 %v102
    %v311 = vunpack.c.l.b16 %v103
    %v312 = vunpack.c.l.b16 %v104
    %v313 = vunpack.c.l.b16 %v105
    %v314 = vunpack.c.l.b16 %v106
    %v315 = vunpack.c.l.b16 %v107
    %v316 = vunpack.c.l.b16 %v108
    %v317 = vunpack.c.l.b16 %v109
    %v318 = vunpack.c.l.b16 %v110
    %v319 = vunpack.c.l.b16 %v111
    %v320 = vunpack.c.l.b16 %v112
    %v321 = vunpack.c.l.b16 %v113
    %v322 = vunpack.c.l.b16 %v114
    %v323 = vunpack.c.l.b16 %v115
    %v324 = vunpack.c.l.b16 %v116
    %v325 = vunpack.c.l.b16 %v117
    %v326 = vunpack.c.l.b16 %v118
    %v327 = vunpack.c.l.b16 %v119
    %v328 = vunpack.c.l.b16 %v120
    %v329 = vunpack.c.l.b16 %v121
    %v330 = vunpack.c.l.b16 %v122
    %v331 = vunpack.c.l.b16 %v123
    %v332 = vunpack.c.l.b16 %v124
    %v333 = vunpack.c.l.b16 %v125
    %v334 = vunpack.c.l.b16 %v126
    %v335 = vunpack.c.l.b16 %v127
    %v336 = vunpack.c.l.b16 %v128
    %v337 = vpack.c.b16 %v290, %v289
    %v338 = vpack.c.b16 %v292, %v291
    %v339 = vpack.c.b16 %v294, %v293
    %v340 = vpack.c.b16 %v296, %v295
    %v341 = vpack.c.b16 %v298, %v297
    %v342 = vpack.c.b16 %v300, %v299
    %v343 = vpack.c.b16 %v302, %v301
    %v344 = vpack.c.b16 %v304, %v303
    %v345 = vpack.c.b16 %v306, %v305
    %v346 = vpack.c.b16 %v308, %v307
    %v347 = vpack.c.b16 %v310, %v309
    %v348 = vpack.c.b16 %v312, %v311
    %v349 = vpack.c.b16 %v314, %v313
    %v350 = vpack.c.b16 %v316, %v315
    %v351 = vpack.c.b16 %v318, %v317
    %v352 = vpack.c.b16 %v320, %v319
    %v353 = vpack.c.b16 %v322, %v321
    %v354 = vpack.c.b16 %v324, %v323
    %v355 = vpack.c.b16 %v326, %v325
    %v356 = vpack.c.b16 %v328, %v327
    %v357 = vpack.c.b16 %v330, %v329
    %v358 = vpack.c.b16 %v332, %v331
    %v359 = vpack.c.b16 %v334, %v333
    %v360 = vpack.c.b16 %v336, %v335
    %v401 = vunpack.c.l.b16 %v225
    %v402 = vunpack.c.l.b16 %v226
    %v403 = vunpack.c.l.b16 %v227
    %v404 = vunpack.c.l.b16 %v228
    %v405 = vunpack.c.l.b16 %v229
    %v406 = vunpack.c.l.b16 %v230
    %v407 = vunpack.c.l.b16 %v231
    %v408 = vunpack.c.l.b16 %v232
    %v409 = vunpack.c.l.b16 %v233
    %v410 = vunpack.c.l.b16 %v234
    %v411 = vunpack.c.l.b16 %v235
    %v412 = vunpack.c.l.b16 %v236
    %v413 = vunpack.c.l.b16 %v237
    %v414 = vunpack.c.l.b16 %v238
    %v415 = vunpack.c.l.b16 %v239
    %v416 = vunpack.c.l.b16 %v240
    %v417 = vpack.c.b16 %v402, %v401
    %v418 = vpack.c.b16 %v404, %v403
    %v419 = vpack.c.b16 %v406, %v405
    %v420 = vpack.c.b16 %v408, %v407
    %v421 = vpack.c.b16 %v410, %v409
    %v422 = vpack.c.b16 %v412, %v411
    %v423 = vpack.c.b16 %v414, %v413
    %v424 = vpack.c.b16 %v416, %v415
    %433 = vmatpush.bf16.msra.mxu0 %v424
    %434 = vmatpush.bf16.msra.mxu0 %v423
    %435 = vmatpush.bf16.msra.mxu0 %v422
    %436 = vmatpush.bf16.msra.mxu0 %v421
    %437 = vmatpush.bf16.msra.mxu0 %v420
    %438 = vmatpush.bf16.msra.mxu0 %v419
    %439 = vmatpush.bf16.msra.mxu0 %v418
    %440 = vmatpush.bf16.msra.mxu0 %v417
    %441 = vmatmul.bf16.gmra.mxu0 %v337
    %v442 = vpop.f32.mrf.mxu0
    %v443 = vadd.f32 0.0, %v442
    %v444 = vpop.f32.mrf.mxu0
    %v445 = vadd.f32 0.0, %v444
    %446 = vmatmul.bf16.gmra.mxu0 %v338
    %v447 = vpop.f32.mrf.mxu0
    %v448 = vadd.f32 0.0, %v447
    %v449 = vpop.f32.mrf.mxu0
    %v450 = vadd.f32 0.0, %v449
    %451 = vmatmul.bf16.gmra.mxu0 %v339
    %v452 = vpop.f32.mrf.mxu0
    %v453 = vadd.f32 0.0, %v452
    %v454 = vpop.f32.mrf.mxu0
    %v455 = vadd.f32 0.0, %v454
    %456 = vmatmul.bf16.gmra.mxu0 %v340
    %v457 = vpop.f32.mrf.mxu0
    %v458 = vadd.f32 0.0, %v457
    %v459 = vpop.f32.mrf.mxu0
    %v460 = vadd.f32 0.0, %v459
    %461 = vmatmul.bf16.gmra.mxu0 %v341
    %v462 = vpop.f32.mrf.mxu0
    %v463 = vadd.f32 0.0, %v462
    %v464 = vpop.f32.mrf.mxu0
    %v465 = vadd.f32 0.0, %v464
    %466 = vmatmul.bf16.gmra.mxu0 %v342
    %v467 = vpop.f32.mrf.mxu0
    %v468 = vadd.f32 0.0, %v467
    %v469 = vpop.f32.mrf.mxu0
    %v470 = vadd.f32 0.0, %v469
    %471 = vmatmul.bf16.gmra.mxu0 %v343
    %v472 = vpop.f32.mrf.mxu0
    %v473 = vadd.f32 0.0, %v472
    %v474 = vpop.f32.mrf.mxu0
    %v475 = vadd.f32 0.0, %v474
    %476 = vmatmul.bf16.gmra.mxu0 %v344
    %v477 = vpop.f32.mrf.mxu0
    %v478 = vadd.f32 0.0, %v477
    %v479 = vpop.f32.mrf.mxu0
    %v480 = vadd.f32 0.0, %v479
    %481 = vmatmul.bf16.gmra.mxu0 %v345
    %v482 = vpop.f32.mrf.mxu0
    %v483 = vadd.f32 0.0, %v482
    %v484 = vpop.f32.mrf.mxu0
    %v485 = vadd.f32 0.0, %v484
    %486 = vmatmul.bf16.gmra.mxu0 %v346
    %v487 = vpop.f32.mrf.mxu0
    %v488 = vadd.f32 0.0, %v487
    %v489 = vpop.f32.mrf.mxu0
    %v490 = vadd.f32 0.0, %v489
    %491 = vmatmul.bf16.gmra.mxu0 %v347
    %v492 = vpop.f32.mrf.mxu0
    %v493 = vadd.f32 0.0, %v492
    %v494 = vpop.f32.mrf.mxu0
    %v495 = vadd.f32 0.0, %v494
    %496 = vmatmul.bf16.gmra.mxu0 %v348
    %v497 = vpop.f32.mrf.mxu0
    %v498 = vadd.f32 0.0, %v497
    %v499 = vpop.f32.mrf.mxu0
    %v500 = vadd.f32 0.0, %v499
    %501 = vmatmul.bf16.gmra.mxu0 %v349
    %v502 = vpop.f32.mrf.mxu0
    %v503 = vadd.f32 0.0, %v502
    %v504 = vpop.f32.mrf.mxu0
    %v505 = vadd.f32 0.0, %v504
    %506 = vmatmul.bf16.gmra.mxu0 %v350
    %v507 = vpop.f32.mrf.mxu0
    %v508 = vadd.f32 0.0, %v507
    %v509 = vpop.f32.mrf.mxu0
    %v510 = vadd.f32 0.0, %v509
    %511 = vmatmul.bf16.gmra.mxu0 %v351
    %v512 = vpop.f32.mrf.mxu0
    %v513 = vadd.f32 0.0, %v512
    %v514 = vpop.f32.mrf.mxu0
    %v515 = vadd.f32 0.0, %v514
    %516 = vmatmul.bf16.gmra.mxu0 %v352
    %v517 = vpop.f32.mrf.mxu0
    %v518 = vadd.f32 0.0, %v517
    %v519 = vpop.f32.mrf.mxu0
    %v520 = vadd.f32 0.0, %v519
    %521 = vmatmul.bf16.gmra.mxu0 %v353
    %v522 = vpop.f32.mrf.mxu0
    %v523 = vadd.f32 0.0, %v522
    %v524 = vpop.f32.mrf.mxu0
    %v525 = vadd.f32 0.0, %v524
    %526 = vmatmul.bf16.gmra.mxu0 %v354
    %v527 = vpop.f32.mrf.mxu0
    %v528 = vadd.f32 0.0, %v527
    %v529 = vpop.f32.mrf.mxu0
    %v530 = vadd.f32 0.0, %v529
    %531 = vmatmul.bf16.gmra.mxu0 %v355
    %v532 = vpop.f32.mrf.mxu0
    %v533 = vadd.f32 0.0, %v532
    %v534 = vpop.f32.mrf.mxu0
    %v535 = vadd.f32 0.0, %v534
    %536 = vmatmul.bf16.gmra.mxu0 %v356
    %v537 = vpop.f32.mrf.mxu0
    %v538 = vadd.f32 0.0, %v537
    %v539 = vpop.f32.mrf.mxu0
    %v540 = vadd.f32 0.0, %v539
    %541 = vmatmul.bf16.gmra.mxu0 %v357
    %v542 = vpop.f32.mrf.mxu0
    %v543 = vadd.f32 0.0, %v542
    %v544 = vpop.f32.mrf.mxu0
    %v545 = vadd.f32 0.0, %v544
    %546 = vmatmul.bf16.gmra.mxu0 %v358
    %v547 = vpop.f32.mrf.mxu0
    %v548 = vadd.f32 0.0, %v547
    %v549 = vpop.f32.mrf.mxu0
    %v550 = vadd.f32 0.0, %v549
    %551 = vmatmul.bf16.gmra.mxu0 %v359
    %v552 = vpop.f32.mrf.mxu0
    %v553 = vadd.f32 0.0, %v552
    %v554 = vpop.f32.mrf.mxu0
    %v555 = vadd.f32 0.0, %v554
    %556 = vmatmul.bf16.gmra.mxu0 %v360
    %v557 = vpop.f32.mrf.mxu0
    %v558 = vadd.f32 0.0, %v557
    %v559 = vpop.f32.mrf.mxu0
    %v560 = vadd.f32 0.0, %v559
    %561 = vdwg.mxu0
    %v562 = vpack.c.bf16 %v445, %v443
    %v563 = vpack.c.bf16 %v450, %v448
    %v564 = vpack.c.bf16 %v455, %v453
    %v565 = vpack.c.bf16 %v460, %v458
    %v566 = vpack.c.bf16 %v465, %v463
    %v567 = vpack.c.bf16 %v470, %v468
    %v568 = vpack.c.bf16 %v475, %v473
    %v569 = vpack.c.bf16 %v480, %v478
    %v570 = vpack.c.bf16 %v485, %v483
    %v571 = vpack.c.bf16 %v490, %v488
    %v572 = vpack.c.bf16 %v495, %v493
    %v573 = vpack.c.bf16 %v500, %v498
    %v574 = vpack.c.bf16 %v505, %v503
    %v575 = vpack.c.bf16 %v510, %v508
    %v576 = vpack.c.bf16 %v515, %v513
    %v577 = vpack.c.bf16 %v520, %v518
    %v578 = vpack.c.bf16 %v525, %v523
    %v579 = vpack.c.bf16 %v530, %v528
    %v580 = vpack.c.bf16 %v535, %v533
    %v581 = vpack.c.bf16 %v540, %v538
    %v582 = vpack.c.bf16 %v545, %v543
    %v583 = vpack.c.bf16 %v550, %v548
    %v584 = vpack.c.bf16 %v555, %v553
    %v585 = vpack.c.bf16 %v560, %v558
    %v682 = vunpack.c.l.b16 %v129
    %v683 = vunpack.c.h.b16 %v129
    %v684 = vunpack.c.l.b16 %v130
    %v685 = vunpack.c.l.b16 %v131
    %v686 = vunpack.c.h.b16 %v131
    %v687 = vunpack.c.l.b16 %v132
    %v688 = vunpack.c.l.b16 %v133
    %v689 = vunpack.c.h.b16 %v133
    %v690 = vunpack.c.l.b16 %v134
    %v691 = vunpack.c.l.b16 %v135
    %v692 = vunpack.c.h.b16 %v135
    %v693 = vunpack.c.l.b16 %v136
    %v694 = vunpack.c.l.b16 %v137
    %v695 = vunpack.c.h.b16 %v137
    %v696 = vunpack.c.l.b16 %v138
    %v697 = vunpack.c.l.b16 %v139
    %v698 = vunpack.c.h.b16 %v139
    %v699 = vunpack.c.l.b16 %v140
    %v700 = vunpack.c.l.b16 %v141
    %v701 = vunpack.c.h.b16 %v141
    %v702 = vunpack.c.l.b16 %v142
    %v703 = vunpack.c.l.b16 %v143
    %v704 = vunpack.c.h.b16 %v143
    %v705 = vunpack.c.l.b16 %v144
    %v706 = vunpack.c.l.b16 %v145
    %v707 = vunpack.c.h.b16 %v145
    %v708 = vunpack.c.l.b16 %v146
    %v709 = vunpack.c.l.b16 %v147
    %v710 = vunpack.c.h.b16 %v147
    %v711 = vunpack.c.l.b16 %v148
    %v712 = vunpack.c.l.b16 %v149
    %v713 = vunpack.c.h.b16 %v149
    %v714 = vunpack.c.l.b16 %v150
    %v715 = vunpack.c.l.b16 %v151
    %v716 = vunpack.c.h.b16 %v151
    %v717 = vunpack.c.l.b16 %v152
    %v718 = vunpack.c.l.b16 %v153
    %v719 = vunpack.c.h.b16 %v153
    %v720 = vunpack.c.l.b16 %v154
    %v721 = vunpack.c.l.b16 %v155
    %v722 = vunpack.c.h.b16 %v155
    %v723 = vunpack.c.l.b16 %v156
    %v724 = vunpack.c.l.b16 %v157
    %v725 = vunpack.c.h.b16 %v157
    %v726 = vunpack.c.l.b16 %v158
    %v727 = vunpack.c.l.b16 %v159
    %v728 = vunpack.c.h.b16 %v159
    %v729 = vunpack.c.l.b16 %v160
    %v730 = vunpack.c.l.b16 %v161
    %v731 = vunpack.c.h.b16 %v161
    %v732 = vunpack.c.l.b16 %v162
    %v733 = vunpack.c.l.b16 %v163
    %v734 = vunpack.c.h.b16 %v163
    %v735 = vunpack.c.l.b16 %v164
    %v736 = vunpack.c.l.b16 %v165
    %v737 = vunpack.c.h.b16 %v165
    %v738 = vunpack.c.l.b16 %v166
    %v739 = vunpack.c.l.b16 %v167
    %v740 = vunpack.c.h.b16 %v167
    %v741 = vunpack.c.l.b16 %v168
    %v742 = vunpack.c.l.b16 %v169
    %v743 = vunpack.c.h.b16 %v169
    %v744 = vunpack.c.l.b16 %v170
    %v745 = vunpack.c.l.b16 %v171
    %v746 = vunpack.c.h.b16 %v171
    %v747 = vunpack.c.l.b16 %v172
    %v748 = vunpack.c.l.b16 %v173
    %v749 = vunpack.c.h.b16 %v173
    %v750 = vunpack.c.l.b16 %v174
    %v751 = vunpack.c.l.b16 %v175
    %v752 = vunpack.c.h.b16 %v175
    %v753 = vunpack.c.l.b16 %v176
    %v754 = vunpack.c.l.b16 %v177
    %v755 = vunpack.c.h.b16 %v177
    %v756 = vunpack.c.l.b16 %v178
    %v757 = vunpack.c.l.b16 %v179
    %v758 = vunpack.c.h.b16 %v179
    %v759 = vunpack.c.l.b16 %v180
    %v760 = vunpack.c.l.b16 %v181
    %v761 = vunpack.c.h.b16 %v181
    %v762 = vunpack.c.l.b16 %v182
    %v763 = vunpack.c.l.b16 %v183
    %v764 = vunpack.c.h.b16 %v183
    %v765 = vunpack.c.l.b16 %v184
    %v766 = vunpack.c.l.b16 %v185
    %v767 = vunpack.c.h.b16 %v185
    %v768 = vunpack.c.l.b16 %v186
    %v769 = vunpack.c.l.b16 %v187
    %v770 = vunpack.c.h.b16 %v187
    %v771 = vunpack.c.l.b16 %v188
    %v772 = vunpack.c.l.b16 %v189
    %v773 = vunpack.c.h.b16 %v189
    %v774 = vunpack.c.l.b16 %v190
    %v775 = vunpack.c.l.b16 %v191
    %v776 = vunpack.c.h.b16 %v191
    %v777 = vunpack.c.l.b16 %v192
    %v778 = vunpack.c.l.b16 %v193
    %v779 = vunpack.c.h.b16 %v193
    %v780 = vunpack.c.l.b16 %v194
    %v781 = vunpack.c.l.b16 %v195
    %v782 = vunpack.c.h.b16 %v195
    %v783 = vunpack.c.l.b16 %v196
    %v784 = vunpack.c.l.b16 %v197
    %v785 = vunpack.c.h.b16 %v197
    %v786 = vunpack.c.l.b16 %v198
    %v787 = vunpack.c.l.b16 %v199
    %v788 = vunpack.c.h.b16 %v199
    %v789 = vunpack.c.l.b16 %v200
    %v790 = vunpack.c.l.b16 %v201
    %v791 = vunpack.c.h.b16 %v201
    %v792 = vunpack.c.l.b16 %v202
    %v793 = vunpack.c.l.b16 %v203
    %v794 = vunpack.c.h.b16 %v203
    %v795 = vunpack.c.l.b16 %v204
    %v796 = vunpack.c.l.b16 %v205
    %v797 = vunpack.c.h.b16 %v205
    %v798 = vunpack.c.l.b16 %v206
    %v799 = vunpack.c.l.b16 %v207
    %v800 = vunpack.c.h.b16 %v207
    %v801 = vunpack.c.l.b16 %v208
    %v802 = vunpack.c.l.b16 %v209
    %v803 = vunpack.c.h.b16 %v209
    %v804 = vunpack.c.l.b16 %v210
    %v805 = vunpack.c.l.b16 %v211
    %v806 = vunpack.c.h.b16 %v211
    %v807 = vunpack.c.l.b16 %v212
    %v808 = vunpack.c.l.b16 %v213
    %v809 = vunpack.c.h.b16 %v213
    %v810 = vunpack.c.l.b16 %v214
    %v811 = vunpack.c.l.b16 %v215
    %v812 = vunpack.c.h.b16 %v215
    %v813 = vunpack.c.l.b16 %v216
    %v814 = vunpack.c.l.b16 %v217
    %v815 = vunpack.c.h.b16 %v217
    %v816 = vunpack.c.l.b16 %v218
    %v817 = vunpack.c.l.b16 %v219
    %v818 = vunpack.c.h.b16 %v219
    %v819 = vunpack.c.l.b16 %v220
    %v820 = vunpack.c.l.b16 %v221
    %v821 = vunpack.c.h.b16 %v221
    %v822 = vunpack.c.l.b16 %v222
    %v823 = vunpack.c.l.b16 %v223
    %v824 = vunpack.c.h.b16 %v223
    %v825 = vunpack.c.l.b16 %v224
    %v826 = vpack.c.b16 %v685, %v682
    %v827 = vpack.c.b16 %v686, %v683
    %v828 = vpack.c.b16 %v687, %v684
    %v829 = vpack.c.b16 %v691, %v688
    %v830 = vpack.c.b16 %v692, %v689
    %v831 = vpack.c.b16 %v693, %v690
    %v832 = vpack.c.b16 %v697, %v694
    %v833 = vpack.c.b16 %v698, %v695
    %v834 = vpack.c.b16 %v699, %v696
    %v835 = vpack.c.b16 %v703, %v700
    %v836 = vpack.c.b16 %v704, %v701
    %v837 = vpack.c.b16 %v705, %v702
    %v838 = vpack.c.b16 %v709, %v706
    %v839 = vpack.c.b16 %v710, %v707
    %v840 = vpack.c.b16 %v711, %v708
    %v841 = vpack.c.b16 %v715, %v712
    %v842 = vpack.c.b16 %v716, %v713
    %v843 = vpack.c.b16 %v717, %v714
    %v844 = vpack.c.b16 %v721, %v718
    %v845 = vpack.c.b16 %v722, %v719
    %v846 = vpack.c.b16 %v723, %v720
    %v847 = vpack.c.b16 %v727, %v724
    %v848 = vpack.c.b16 %v728, %v725
    %v849 = vpack.c.b16 %v729, %v726
    %v850 = vpack.c.b16 %v733, %v730
    %v851 = vpack.c.b16 %v734, %v731
    %v852 = vpack.c.b16 %v735, %v732
    %v853 = vpack.c.b16 %v739, %v736
    %v854 = vpack.c.b16 %v740, %v737
    %v855 = vpack.c.b16 %v741, %v738
    %v856 = vpack.c.b16 %v745, %v742
    %v857 = vpack.c.b16 %v746, %v743
    %v858 = vpack.c.b16 %v747, %v744
    %v859 = vpack.c.b16 %v751, %v748
    %v860 = vpack.c.b16 %v752, %v749
    %v861 = vpack.c.b16 %v753, %v750
    %v862 = vpack.c.b16 %v757, %v754
    %v863 = vpack.c.b16 %v758, %v755
    %v864 = vpack.c.b16 %v759, %v756
    %v865 = vpack.c.b16 %v763, %v760
    %v866 = vpack.c.b16 %v764, %v761
    %v867 = vpack.c.b16 %v765, %v762
    %v868 = vpack.c.b16 %v769, %v766
    %v869 = vpack.c.b16 %v770, %v767
    %v870 = vpack.c.b16 %v771, %v768
    %v871 = vpack.c.b16 %v775, %v772
    %v872 = vpack.c.b16 %v776, %v773
    %v873 = vpack.c.b16 %v777, %v774
    %v874 = vpack.c.b16 %v781, %v778
    %v875 = vpack.c.b16 %v782, %v779
    %v876 = vpack.c.b16 %v783, %v780
    %v877 = vpack.c.b16 %v787, %v784
    %v878 = vpack.c.b16 %v788, %v785
    %v879 = vpack.c.b16 %v789, %v786
    %v880 = vpack.c.b16 %v793, %v790
    %v881 = vpack.c.b16 %v794, %v791
    %v882 = vpack.c.b16 %v795, %v792
    %v883 = vpack.c.b16 %v799, %v796
    %v884 = vpack.c.b16 %v800, %v797
    %v885 = vpack.c.b16 %v801, %v798
    %v886 = vpack.c.b16 %v805, %v802
    %v887 = vpack.c.b16 %v806, %v803
    %v888 = vpack.c.b16 %v807, %v804
    %v889 = vpack.c.b16 %v811, %v808
    %v890 = vpack.c.b16 %v812, %v809
    %v891 = vpack.c.b16 %v813, %v810
    %v892 = vpack.c.b16 %v817, %v814
    %v893 = vpack.c.b16 %v818, %v815
    %v894 = vpack.c.b16 %v819, %v816
    %v895 = vpack.c.b16 %v823, %v820
    %v896 = vpack.c.b16 %v824, %v821
    %v897 = vpack.c.b16 %v825, %v822
    %970 = vmatpush.bf16.msra.mxu0 %v569
    %971 = vmatpush.bf16.msra.mxu0 %v568
    %972 = vmatpush.bf16.msra.mxu0 %v567
    %973 = vmatpush.bf16.msra.mxu0 %v566
    %974 = vmatpush.bf16.msra.mxu0 %v565
    %975 = vmatpush.bf16.msra.mxu0 %v564
    %976 = vmatpush.bf16.msra.mxu0 %v563
    %977 = vmatpush.bf16.msra.mxu0 %v562
    %978 = vmatmul.bf16.gmra.mxu0 %v826
    %v979 = vpop.f32.mrf.mxu0
    %v980 = vadd.f32 0.0, %v979
    %v981 = vpop.f32.mrf.mxu0
    %v982 = vadd.f32 0.0, %v981
    %983 = vmatmul.bf16.gmra.mxu0 %v829
    %v984 = vpop.f32.mrf.mxu0
    %v985 = vadd.f32 0.0, %v984
    %v986 = vpop.f32.mrf.mxu0
    %v987 = vadd.f32 0.0, %v986
    %988 = vmatmul.bf16.gmra.mxu0 %v832
    %v989 = vpop.f32.mrf.mxu0
    %v990 = vadd.f32 0.0, %v989
    %v991 = vpop.f32.mrf.mxu0
    %v992 = vadd.f32 0.0, %v991
    %993 = vmatmul.bf16.gmra.mxu0 %v835
    %v994 = vpop.f32.mrf.mxu0
    %v995 = vadd.f32 0.0, %v994
    %v996 = vpop.f32.mrf.mxu0
    %v997 = vadd.f32 0.0, %v996
    %998 = vmatmul.bf16.gmra.mxu0 %v838
    %v999 = vpop.f32.mrf.mxu0
    %v1000 = vadd.f32 0.0, %v999
    %v1001 = vpop.f32.mrf.mxu0
    %v1002 = vadd.f32 0.0, %v1001
    %1003 = vmatmul.bf16.gmra.mxu0 %v841
    %v1004 = vpop.f32.mrf.mxu0
    %v1005 = vadd.f32 0.0, %v1004
    %v1006 = vpop.f32.mrf.mxu0
    %v1007 = vadd.f32 0.0, %v1006
    %1008 = vmatmul.bf16.gmra.mxu0 %v844
    %v1009 = vpop.f32.mrf.mxu0
    %v1010 = vadd.f32 0.0, %v1009
    %v1011 = vpop.f32.mrf.mxu0
    %v1012 = vadd.f32 0.0, %v1011
    %1013 = vmatmul.bf16.gmra.mxu0 %v847
    %v1014 = vpop.f32.mrf.mxu0
    %v1015 = vadd.f32 0.0, %v1014
    %v1016 = vpop.f32.mrf.mxu0
    %v1017 = vadd.f32 0.0, %v1016
    %1018 = vmatmul.bf16.gmra.mxu0 %v850
    %v1019 = vpop.f32.mrf.mxu0
    %v1020 = vadd.f32 0.0, %v1019
    %v1021 = vpop.f32.mrf.mxu0
    %v1022 = vadd.f32 0.0, %v1021
    %1023 = vmatmul.bf16.gmra.mxu0 %v853
    %v1024 = vpop.f32.mrf.mxu0
    %v1025 = vadd.f32 0.0, %v1024
    %v1026 = vpop.f32.mrf.mxu0
    %v1027 = vadd.f32 0.0, %v1026
    %1028 = vmatmul.bf16.gmra.mxu0 %v856
    %v1029 = vpop.f32.mrf.mxu0
    %v1030 = vadd.f32 0.0, %v1029
    %v1031 = vpop.f32.mrf.mxu0
    %v1032 = vadd.f32 0.0, %v1031
    %1033 = vmatmul.bf16.gmra.mxu0 %v859
    %v1034 = vpop.f32.mrf.mxu0
    %v1035 = vadd.f32 0.0, %v1034
    %v1036 = vpop.f32.mrf.mxu0
    %v1037 = vadd.f32 0.0, %v1036
    %1038 = vmatmul.bf16.gmra.mxu0 %v862
    %v1039 = vpop.f32.mrf.mxu0
    %v1040 = vadd.f32 0.0, %v1039
    %v1041 = vpop.f32.mrf.mxu0
    %v1042 = vadd.f32 0.0, %v1041
    %1043 = vmatmul.bf16.gmra.mxu0 %v865
    %v1044 = vpop.f32.mrf.mxu0
    %v1045 = vadd.f32 0.0, %v1044
    %v1046 = vpop.f32.mrf.mxu0
    %v1047 = vadd.f32 0.0, %v1046
    %1048 = vmatmul.bf16.gmra.mxu0 %v868
    %v1049 = vpop.f32.mrf.mxu0
    %v1050 = vadd.f32 0.0, %v1049
    %v1051 = vpop.f32.mrf.mxu0
    %v1052 = vadd.f32 0.0, %v1051
    %1053 = vmatmul.bf16.gmra.mxu0 %v871
    %v1054 = vpop.f32.mrf.mxu0
    %v1055 = vadd.f32 0.0, %v1054
    %v1056 = vpop.f32.mrf.mxu0
    %v1057 = vadd.f32 0.0, %v1056
    %1058 = vmatmul.bf16.gmra.mxu0 %v874
    %v1059 = vpop.f32.mrf.mxu0
    %v1060 = vadd.f32 0.0, %v1059
    %v1061 = vpop.f32.mrf.mxu0
    %v1062 = vadd.f32 0.0, %v1061
    %1063 = vmatmul.bf16.gmra.mxu0 %v877
    %v1064 = vpop.f32.mrf.mxu0
    %v1065 = vadd.f32 0.0, %v1064
    %v1066 = vpop.f32.mrf.mxu0
    %v1067 = vadd.f32 0.0, %v1066
    %1068 = vmatmul.bf16.gmra.mxu0 %v880
    %v1069 = vpop.f32.mrf.mxu0
    %v1070 = vadd.f32 0.0, %v1069
    %v1071 = vpop.f32.mrf.mxu0
    %v1072 = vadd.f32 0.0, %v1071
    %1073 = vmatmul.bf16.gmra.mxu0 %v883
    %v1074 = vpop.f32.mrf.mxu0
    %v1075 = vadd.f32 0.0, %v1074
    %v1076 = vpop.f32.mrf.mxu0
    %v1077 = vadd.f32 0.0, %v1076
    %1078 = vmatmul.bf16.gmra.mxu0 %v886
    %v1079 = vpop.f32.mrf.mxu0
    %v1080 = vadd.f32 0.0, %v1079
    %v1081 = vpop.f32.mrf.mxu0
    %v1082 = vadd.f32 0.0, %v1081
    %1083 = vmatmul.bf16.gmra.mxu0 %v889
    %v1084 = vpop.f32.mrf.mxu0
    %v1085 = vadd.f32 0.0, %v1084
    %v1086 = vpop.f32.mrf.mxu0
    %v1087 = vadd.f32 0.0, %v1086
    %1088 = vmatmul.bf16.gmra.mxu0 %v892
    %v1089 = vpop.f32.mrf.mxu0
    %v1090 = vadd.f32 0.0, %v1089
    %v1091 = vpop.f32.mrf.mxu0
    %v1092 = vadd.f32 0.0, %v1091
    %1093 = vmatmul.bf16.gmra.mxu0 %v895
    %v1094 = vpop.f32.mrf.mxu0
    %v1095 = vadd.f32 0.0, %v1094
    %v1096 = vpop.f32.mrf.mxu0
    %v1097 = vadd.f32 0.0, %v1096
    %1098 = vdwg.mxu0
    %1099 = vmatpush.bf16.msra.mxu0 %v577
    %1100 = vmatpush.bf16.msra.mxu0 %v576
    %1101 = vmatpush.bf16.msra.mxu0 %v575
    %1102 = vmatpush.bf16.msra.mxu0 %v574
    %1103 = vmatpush.bf16.msra.mxu0 %v573
    %1104 = vmatpush.bf16.msra.mxu0 %v572
    %1105 = vmatpush.bf16.msra.mxu0 %v571
    %1106 = vmatpush.bf16.msra.mxu0 %v570
    %1107 = vmatmul.bf16.gmra.mxu0 %v827
    %v1108 = vpop.f32.mrf.mxu0
    %v1109 = vadd.f32 %v980, %v1108
    %v1110 = vpop.f32.mrf.mxu0
    %v1111 = vadd.f32 %v982, %v1110
    %1112 = vmatmul.bf16.gmra.mxu0 %v830
    %v1113 = vpop.f32.mrf.mxu0
    %v1114 = vadd.f32 %v985, %v1113
    %v1115 = vpop.f32.mrf.mxu0
    %v1116 = vadd.f32 %v987, %v1115
    %1117 = vmatmul.bf16.gmra.mxu0 %v833
    %v1118 = vpop.f32.mrf.mxu0
    %v1119 = vadd.f32 %v990, %v1118
    %v1120 = vpop.f32.mrf.mxu0
    %v1121 = vadd.f32 %v992, %v1120
    %1122 = vmatmul.bf16.gmra.mxu0 %v836
    %v1123 = vpop.f32.mrf.mxu0
    %v1124 = vadd.f32 %v995, %v1123
    %v1125 = vpop.f32.mrf.mxu0
    %v1126 = vadd.f32 %v997, %v1125
    %1127 = vmatmul.bf16.gmra.mxu0 %v839
    %v1128 = vpop.f32.mrf.mxu0
    %v1129 = vadd.f32 %v1000, %v1128
    %v1130 = vpop.f32.mrf.mxu0
    %v1131 = vadd.f32 %v1002, %v1130
    %1132 = vmatmul.bf16.gmra.mxu0 %v842
    %v1133 = vpop.f32.mrf.mxu0
    %v1134 = vadd.f32 %v1005, %v1133
    %v1135 = vpop.f32.mrf.mxu0
    %v1136 = vadd.f32 %v1007, %v1135
    %1137 = vmatmul.bf16.gmra.mxu0 %v845
    %v1138 = vpop.f32.mrf.mxu0
    %v1139 = vadd.f32 %v1010, %v1138
    %v1140 = vpop.f32.mrf.mxu0
    %v1141 = vadd.f32 %v1012, %v1140
    %1142 = vmatmul.bf16.gmra.mxu0 %v848
    %v1143 = vpop.f32.mrf.mxu0
    %v1144 = vadd.f32 %v1015, %v1143
    %v1145 = vpop.f32.mrf.mxu0
    %v1146 = vadd.f32 %v1017, %v1145
    %1147 = vmatmul.bf16.gmra.mxu0 %v851
    %v1148 = vpop.f32.mrf.mxu0
    %v1149 = vadd.f32 %v1020, %v1148
    %v1150 = vpop.f32.mrf.mxu0
    %v1151 = vadd.f32 %v1022, %v1150
    %1152 = vmatmul.bf16.gmra.mxu0 %v854
    %v1153 = vpop.f32.mrf.mxu0
    %v1154 = vadd.f32 %v1025, %v1153
    %v1155 = vpop.f32.mrf.mxu0
    %v1156 = vadd.f32 %v1027, %v1155
    %1157 = vmatmul.bf16.gmra.mxu0 %v857
    %v1158 = vpop.f32.mrf.mxu0
    %v1159 = vadd.f32 %v1030, %v1158
    %v1160 = vpop.f32.mrf.mxu0
    %v1161 = vadd.f32 %v1032, %v1160
    %1162 = vmatmul.bf16.gmra.mxu0 %v860
    %v1163 = vpop.f32.mrf.mxu0
    %v1164 = vadd.f32 %v1035, %v1163
    %v1165 = vpop.f32.mrf.mxu0
    %v1166 = vadd.f32 %v1037, %v1165
    %1167 = vmatmul.bf16.gmra.mxu0 %v863
    %v1168 = vpop.f32.mrf.mxu0
    %v1169 = vadd.f32 %v1040, %v1168
    %v1170 = vpop.f32.mrf.mxu0
    %v1171 = vadd.f32 %v1042, %v1170
    %1172 = vmatmul.bf16.gmra.mxu0 %v866
    %v1173 = vpop.f32.mrf.mxu0
    %v1174 = vadd.f32 %v1045, %v1173
    %v1175 = vpop.f32.mrf.mxu0
    %v1176 = vadd.f32 %v1047, %v1175
    %1177 = vmatmul.bf16.gmra.mxu0 %v869
    %v1178 = vpop.f32.mrf.mxu0
    %v1179 = vadd.f32 %v1050, %v1178
    %v1180 = vpop.f32.mrf.mxu0
    %v1181 = vadd.f32 %v1052, %v1180
    %1182 = vmatmul.bf16.gmra.mxu0 %v872
    %v1183 = vpop.f32.mrf.mxu0
    %v1184 = vadd.f32 %v1055, %v1183
    %v1185 = vpop.f32.mrf.mxu0
    %v1186 = vadd.f32 %v1057, %v1185
    %1187 = vmatmul.bf16.gmra.mxu0 %v875
    %v1188 = vpop.f32.mrf.mxu0
    %v1189 = vadd.f32 %v1060, %v1188
    %v1190 = vpop.f32.mrf.mxu0
    %v1191 = vadd.f32 %v1062, %v1190
    %1192 = vmatmul.bf16.gmra.mxu0 %v878
    %v1193 = vpop.f32.mrf.mxu0
    %v1194 = vadd.f32 %v1065, %v1193
    %v1195 = vpop.f32.mrf.mxu0
    %v1196 = vadd.f32 %v1067, %v1195
    %1197 = vmatmul.bf16.gmra.mxu0 %v881
    %v1198 = vpop.f32.mrf.mxu0
    %v1199 = vadd.f32 %v1070, %v1198
    %v1200 = vpop.f32.mrf.mxu0
    %v1201 = vadd.f32 %v1072, %v1200
    %1202 = vmatmul.bf16.gmra.mxu0 %v884
    %v1203 = vpop.f32.mrf.mxu0
    %v1204 = vadd.f32 %v1075, %v1203
    %v1205 = vpop.f32.mrf.mxu0
    %v1206 = vadd.f32 %v1077, %v1205
    %1207 = vmatmul.bf16.gmra.mxu0 %v887
    %v1208 = vpop.f32.mrf.mxu0
    %v1209 = vadd.f32 %v1080, %v1208
    %v1210 = vpop.f32.mrf.mxu0
    %v1211 = vadd.f32 %v1082, %v1210
    %1212 = vmatmul.bf16.gmra.mxu0 %v890
    %v1213 = vpop.f32.mrf.mxu0
    %v1214 = vadd.f32 %v1085, %v1213
    %v1215 = vpop.f32.mrf.mxu0
    %v1216 = vadd.f32 %v1087, %v1215
    %1217 = vmatmul.bf16.gmra.mxu0 %v893
    %v1218 = vpop.f32.mrf.mxu0
    %v1219 = vadd.f32 %v1090, %v1218
    %v1220 = vpop.f32.mrf.mxu0
    %v1221 = vadd.f32 %v1092, %v1220
    %1222 = vmatmul.bf16.gmra.mxu0 %v896
    %v1223 = vpop.f32.mrf.mxu0
    %v1224 = vadd.f32 %v1095, %v1223
    %v1225 = vpop.f32.mrf.mxu0
    %v1226 = vadd.f32 %v1097, %v1225
    %1227 = vdwg.mxu0
    %1228 = vmatpush.bf16.msra.mxu0 %v585
    %1229 = vmatpush.bf16.msra.mxu0 %v584
    %1230 = vmatpush.bf16.msra.mxu0 %v583
    %1231 = vmatpush.bf16.msra.mxu0 %v582
    %1232 = vmatpush.bf16.msra.mxu0 %v581
    %1233 = vmatpush.bf16.msra.mxu0 %v580
    %1234 = vmatpush.bf16.msra.mxu0 %v579
    %1235 = vmatpush.bf16.msra.mxu0 %v578
    %1236 = vmatmul.bf16.gmra.mxu0 %v828
    %v1237 = vpop.f32.mrf.mxu0
    %v1238 = vadd.f32 %v1109, %v1237
    %v1239 = vpop.f32.mrf.mxu0
    %v1240 = vadd.f32 %v1111, %v1239
    %1241 = vmatmul.bf16.gmra.mxu0 %v831
    %v1242 = vpop.f32.mrf.mxu0
    %v1243 = vadd.f32 %v1114, %v1242
    %v1244 = vpop.f32.mrf.mxu0
    %v1245 = vadd.f32 %v1116, %v1244
    %1246 = vmatmul.bf16.gmra.mxu0 %v834
    %v1247 = vpop.f32.mrf.mxu0
    %v1248 = vadd.f32 %v1119, %v1247
    %v1249 = vpop.f32.mrf.mxu0
    %v1250 = vadd.f32 %v1121, %v1249
    %1251 = vmatmul.bf16.gmra.mxu0 %v837
    %v1252 = vpop.f32.mrf.mxu0
    %v1253 = vadd.f32 %v1124, %v1252
    %v1254 = vpop.f32.mrf.mxu0
    %v1255 = vadd.f32 %v1126, %v1254
    %1256 = vmatmul.bf16.gmra.mxu0 %v840
    %v1257 = vpop.f32.mrf.mxu0
    %v1258 = vadd.f32 %v1129, %v1257
    %v1259 = vpop.f32.mrf.mxu0
    %v1260 = vadd.f32 %v1131, %v1259
    %1261 = vmatmul.bf16.gmra.mxu0 %v843
    %v1262 = vpop.f32.mrf.mxu0
    %v1263 = vadd.f32 %v1134, %v1262
    %v1264 = vpop.f32.mrf.mxu0
    %v1265 = vadd.f32 %v1136, %v1264
    %1266 = vmatmul.bf16.gmra.mxu0 %v846
    %v1267 = vpop.f32.mrf.mxu0
    %v1268 = vadd.f32 %v1139, %v1267
    %v1269 = vpop.f32.mrf.mxu0
    %v1270 = vadd.f32 %v1141, %v1269
    %1271 = vmatmul.bf16.gmra.mxu0 %v849
    %v1272 = vpop.f32.mrf.mxu0
    %v1273 = vadd.f32 %v1144, %v1272
    %v1274 = vpop.f32.mrf.mxu0
    %v1275 = vadd.f32 %v1146, %v1274
    %1276 = vmatmul.bf16.gmra.mxu0 %v852
    %v1277 = vpop.f32.mrf.mxu0
    %v1278 = vadd.f32 %v1149, %v1277
    %v1279 = vpop.f32.mrf.mxu0
    %v1280 = vadd.f32 %v1151, %v1279
    %1281 = vmatmul.bf16.gmra.mxu0 %v855
    %v1282 = vpop.f32.mrf.mxu0
    %v1283 = vadd.f32 %v1154, %v1282
    %v1284 = vpop.f32.mrf.mxu0
    %v1285 = vadd.f32 %v1156, %v1284
    %1286 = vmatmul.bf16.gmra.mxu0 %v858
    %v1287 = vpop.f32.mrf.mxu0
    %v1288 = vadd.f32 %v1159, %v1287
    %v1289 = vpop.f32.mrf.mxu0
    %v1290 = vadd.f32 %v1161, %v1289
    %1291 = vmatmul.bf16.gmra.mxu0 %v861
    %v1292 = vpop.f32.mrf.mxu0
    %v1293 = vadd.f32 %v1164, %v1292
    %v1294 = vpop.f32.mrf.mxu0
    %v1295 = vadd.f32 %v1166, %v1294
    %1296 = vmatmul.bf16.gmra.mxu0 %v864
    %v1297 = vpop.f32.mrf.mxu0
    %v1298 = vadd.f32 %v1169, %v1297
    %v1299 = vpop.f32.mrf.mxu0
    %v1300 = vadd.f32 %v1171, %v1299
    %1301 = vmatmul.bf16.gmra.mxu0 %v867
    %v1302 = vpop.f32.mrf.mxu0
    %v1303 = vadd.f32 %v1174, %v1302
    %v1304 = vpop.f32.mrf.mxu0
    %v1305 = vadd.f32 %v1176, %v1304
    %1306 = vmatmul.bf16.gmra.mxu0 %v870
    %v1307 = vpop.f32.mrf.mxu0
    %v1308 = vadd.f32 %v1179, %v1307
    %v1309 = vpop.f32.mrf.mxu0
    %v1310 = vadd.f32 %v1181, %v1309
    %1311 = vmatmul.bf16.gmra.mxu0 %v873
    %v1312 = vpop.f32.mrf.mxu0
    %v1313 = vadd.f32 %v1184, %v1312
    %v1314 = vpop.f32.mrf.mxu0
    %v1315 = vadd.f32 %v1186, %v1314
    %1316 = vmatmul.bf16.gmra.mxu0 %v876
    %v1317 = vpop.f32.mrf.mxu0
    %v1318 = vadd.f32 %v1189, %v1317
    %v1319 = vpop.f32.mrf.mxu0
    %v1320 = vadd.f32 %v1191, %v1319
    %1321 = vmatmul.bf16.gmra.mxu0 %v879
    %v1322 = vpop.f32.mrf.mxu0
    %v1323 = vadd.f32 %v1194, %v1322
    %v1324 = vpop.f32.mrf.mxu0
    %v1325 = vadd.f32 %v1196, %v1324
    %1326 = vmatmul.bf16.gmra.mxu0 %v882
    %v1327 = vpop.f32.mrf.mxu0
    %v1328 = vadd.f32 %v1199, %v1327
    %v1329 = vpop.f32.mrf.mxu0
    %v1330 = vadd.f32 %v1201, %v1329
    %1331 = vmatmul.bf16.gmra.mxu0 %v885
    %v1332 = vpop.f32.mrf.mxu0
    %v1333 = vadd.f32 %v1204, %v1332
    %v1334 = vpop.f32.mrf.mxu0
    %v1335 = vadd.f32 %v1206, %v1334
    %1336 = vmatmul.bf16.gmra.mxu0 %v888
    %v1337 = vpop.f32.mrf.mxu0
    %v1338 = vadd.f32 %v1209, %v1337
    %v1339 = vpop.f32.mrf.mxu0
    %v1340 = vadd.f32 %v1211, %v1339
    %1341 = vmatmul.bf16.gmra.mxu0 %v891
    %v1342 = vpop.f32.mrf.mxu0
    %v1343 = vadd.f32 %v1214, %v1342
    %v1344 = vpop.f32.mrf.mxu0
    %v1345 = vadd.f32 %v1216, %v1344
    %1346 = vmatmul.bf16.gmra.mxu0 %v894
    %v1347 = vpop.f32.mrf.mxu0
    %v1348 = vadd.f32 %v1219, %v1347
    %v1349 = vpop.f32.mrf.mxu0
    %v1350 = vadd.f32 %v1221, %v1349
    %1351 = vmatmul.bf16.gmra.mxu0 %v897
    %v1352 = vpop.f32.mrf.mxu0
    %v1353 = vadd.f32 %v1224, %v1352
    %v1354 = vpop.f32.mrf.mxu0
    %v1355 = vadd.f32 %v1226, %v1354
    %1356 = vdwg.mxu0
    %v1357 = vmax.f32 %v1238, 0.0
    %v1358 = vmax.f32 %v1240, 0.0
    %v1359 = vmax.f32 %v1243, 0.0
    %v1360 = vmax.f32 %v1245, 0.0
    %v1361 = vmax.f32 %v1248, 0.0
    %v1362 = vmax.f32 %v1250, 0.0
    %v1363 = vmax.f32 %v1253, 0.0
    %v1364 = vmax.f32 %v1255, 0.0
    %v1365 = vmax.f32 %v1258, 0.0
    %v1366 = vmax.f32 %v1260, 0.0
    %v1367 = vmax.f32 %v1263, 0.0
    %v1368 = vmax.f32 %v1265, 0.0
    %v1369 = vmax.f32 %v1268, 0.0
    %v1370 = vmax.f32 %v1270, 0.0
    %v1371 = vmax.f32 %v1273, 0.0
    %v1372 = vmax.f32 %v1275, 0.0
    %v1373 = vmax.f32 %v1278, 0.0
    %v1374 = vmax.f32 %v1280, 0.0
    %v1375 = vmax.f32 %v1283, 0.0
    %v1376 = vmax.f32 %v1285, 0.0
    %v1377 = vmax.f32 %v1288, 0.0
    %v1378 = vmax.f32 %v1290, 0.0
    %v1379 = vmax.f32 %v1293, 0.0
    %v1380 = vmax.f32 %v1295, 0.0
    %v1381 = vmax.f32 %v1298, 0.0
    %v1382 = vmax.f32 %v1300, 0.0
    %v1383 = vmax.f32 %v1303, 0.0
    %v1384 = vmax.f32 %v1305, 0.0
    %v1385 = vmax.f32 %v1308, 0.0
    %v1386 = vmax.f32 %v1310, 0.0
    %v1387 = vmax.f32 %v1313, 0.0
    %v1388 = vmax.f32 %v1315, 0.0
    %v1389 = vmax.f32 %v1318, 0.0
    %v1390 = vmax.f32 %v1320, 0.0
    %v1391 = vmax.f32 %v1323, 0.0
    %v1392 = vmax.f32 %v1325, 0.0
    %v1393 = vmax.f32 %v1328, 0.0
    %v1394 = vmax.f32 %v1330, 0.0
    %v1395 = vmax.f32 %v1333, 0.0
    %v1396 = vmax.f32 %v1335, 0.0
    %v1397 = vmax.f32 %v1338, 0.0
    %v1398 = vmax.f32 %v1340, 0.0
    %v1399 = vmax.f32 %v1343, 0.0
    %v1400 = vmax.f32 %v1345, 0.0
    %v1401 = vmax.f32 %v1348, 0.0
    %v1402 = vmax.f32 %v1350, 0.0
    %v1403 = vmax.f32 %v1353, 0.0
    %v1404 = vmax.f32 %v1355, 0.0
    %v1405 = vpack.c.bf16 %v1358, %v1357
    %v1406 = vpack.c.bf16 %v1360, %v1359
    %v1407 = vpack.c.bf16 %v1362, %v1361
    %v1408 = vpack.c.bf16 %v1364, %v1363
    %v1409 = vpack.c.bf16 %v1366, %v1365
    %v1410 = vpack.c.bf16 %v1368, %v1367
    %v1411 = vpack.c.bf16 %v1370, %v1369
    %v1412 = vpack.c.bf16 %v1372, %v1371
    %v1413 = vpack.c.bf16 %v1374, %v1373
    %v1414 = vpack.c.bf16 %v1376, %v1375
    %v1415 = vpack.c.bf16 %v1378, %v1377
    %v1416 = vpack.c.bf16 %v1380, %v1379
    %v1417 = vpack.c.bf16 %v1382, %v1381
    %v1418 = vpack.c.bf16 %v1384, %v1383
    %v1419 = vpack.c.bf16 %v1386, %v1385
    %v1420 = vpack.c.bf16 %v1388, %v1387
    %v1421 = vpack.c.bf16 %v1390, %v1389
    %v1422 = vpack.c.bf16 %v1392, %v1391
    %v1423 = vpack.c.bf16 %v1394, %v1393
    %v1424 = vpack.c.bf16 %v1396, %v1395
    %v1425 = vpack.c.bf16 %v1398, %v1397
    %v1426 = vpack.c.bf16 %v1400, %v1399
    %v1427 = vpack.c.bf16 %v1402, %v1401
    %v1428 = vpack.c.bf16 %v1404, %v1403
    %v1429 = vld [vmem:[#allocation8] sm:$0xf]
    %v1430 = vld [vmem:[#allocation8 + $0x4] sm:$0xf]
    %v1431 = vld [vmem:[#allocation8 + $0x8] sm:$0xf]
    %v1432 = vld [vmem:[#allocation8 + $0xc] sm:$0xf]
    %v1433 = vld [vmem:[#allocation8 + $0x10] sm:$0xf]
    %v1434 = vld [vmem:[#allocation8 + $0x14] sm:$0xf]
    %v1435 = vld [vmem:[#allocation8 + $0x18] sm:$0xf]
    %v1436 = vld [vmem:[#allocation8 + $0x1c] sm:$0xf]
    %v1437 = vld [vmem:[#allocation8 + $0x20] sm:$0xf]
    %v1438 = vld [vmem:[#allocation8 + $0x24] sm:$0xf]
    %v1439 = vld [vmem:[#allocation8 + $0x28] sm:$0xf]
    %v1440 = vld [vmem:[#allocation8 + $0x2c] sm:$0xf]
    %v1441 = vld [vmem:[#allocation8 + $0x30] sm:$0xf]
    %v1442 = vld [vmem:[#allocation8 + $0x34] sm:$0xf]
    %v1443 = vld [vmem:[#allocation8 + $0x38] sm:$0xf]
    %v1444 = vld [vmem:[#allocation8 + $0x3c] sm:$0xf]
    %v1461 = vunpack.c.l.b16 %v1429
    %v1462 = vunpack.c.l.b16 %v1430
    %v1463 = vunpack.c.l.b16 %v1431
    %v1464 = vunpack.c.l.b16 %v1432
    %v1465 = vunpack.c.l.b16 %v1433
    %v1466 = vunpack.c.l.b16 %v1434
    %v1467 = vunpack.c.l.b16 %v1435
    %v1468 = vunpack.c.l.b16 %v1436
    %v1469 = vunpack.c.l.b16 %v1437
    %v1470 = vunpack.c.l.b16 %v1438
    %v1471 = vunpack.c.l.b16 %v1439
    %v1472 = vunpack.c.l.b16 %v1440
    %v1473 = vunpack.c.l.b16 %v1441
    %v1474 = vunpack.c.l.b16 %v1442
    %v1475 = vunpack.c.l.b16 %v1443
    %v1476 = vunpack.c.l.b16 %v1444
    %v1477 = vpack.c.b16 %v1462, %v1461
    %v1478 = vpack.c.b16 %v1464, %v1463
    %v1479 = vpack.c.b16 %v1466, %v1465
    %v1480 = vpack.c.b16 %v1468, %v1467
    %v1481 = vpack.c.b16 %v1470, %v1469
    %v1482 = vpack.c.b16 %v1472, %v1471
    %v1483 = vpack.c.b16 %v1474, %v1473
    %v1484 = vpack.c.b16 %v1476, %v1475
    %1493 = vmatpush.bf16.msra.mxu0 %v1484
    %1494 = vmatpush.bf16.msra.mxu0 %v1483
    %1495 = vmatpush.bf16.msra.mxu0 %v1482
    %1496 = vmatpush.bf16.msra.mxu0 %v1481
    %1497 = vmatpush.bf16.msra.mxu0 %v1480
    %1498 = vmatpush.bf16.msra.mxu0 %v1479
    %1499 = vmatpush.bf16.msra.mxu0 %v1478
    %1500 = vmatpush.bf16.msra.mxu0 %v1477
    %1501 = vmatmul.bf16.gmra.mxu0 %v1405
    %v1502 = vpop.f32.mrf.mxu0
    %v1503 = vadd.f32 0.0, %v1502
    %v1504 = vpop.f32.mrf.mxu0
    %v1505 = vadd.f32 0.0, %v1504
    %1506 = vmatmul.bf16.gmra.mxu0 %v1406
    %v1507 = vpop.f32.mrf.mxu0
    %v1508 = vadd.f32 0.0, %v1507
    %v1509 = vpop.f32.mrf.mxu0
    %v1510 = vadd.f32 0.0, %v1509
    %1511 = vmatmul.bf16.gmra.mxu0 %v1407
    %v1512 = vpop.f32.mrf.mxu0
    %v1513 = vadd.f32 0.0, %v1512
    %v1514 = vpop.f32.mrf.mxu0
    %v1515 = vadd.f32 0.0, %v1514
    %1516 = vmatmul.bf16.gmra.mxu0 %v1408
    %v1517 = vpop.f32.mrf.mxu0
    %v1518 = vadd.f32 0.0, %v1517
    %v1519 = vpop.f32.mrf.mxu0
    %v1520 = vadd.f32 0.0, %v1519
    %1521 = vmatmul.bf16.gmra.mxu0 %v1409
    %v1522 = vpop.f32.mrf.mxu0
    %v1523 = vadd.f32 0.0, %v1522
    %v1524 = vpop.f32.mrf.mxu0
    %v1525 = vadd.f32 0.0, %v1524
    %1526 = vmatmul.bf16.gmra.mxu0 %v1410
    %v1527 = vpop.f32.mrf.mxu0
    %v1528 = vadd.f32 0.0, %v1527
    %v1529 = vpop.f32.mrf.mxu0
    %v1530 = vadd.f32 0.0, %v1529
    %1531 = vmatmul.bf16.gmra.mxu0 %v1411
    %v1532 = vpop.f32.mrf.mxu0
    %v1533 = vadd.f32 0.0, %v1532
    %v1534 = vpop.f32.mrf.mxu0
    %v1535 = vadd.f32 0.0, %v1534
    %1536 = vmatmul.bf16.gmra.mxu0 %v1412
    %v1537 = vpop.f32.mrf.mxu0
    %v1538 = vadd.f32 0.0, %v1537
    %v1539 = vpop.f32.mrf.mxu0
    %v1540 = vadd.f32 0.0, %v1539
    %1541 = vmatmul.bf16.gmra.mxu0 %v1413
    %v1542 = vpop.f32.mrf.mxu0
    %v1543 = vadd.f32 0.0, %v1542
    %v1544 = vpop.f32.mrf.mxu0
    %v1545 = vadd.f32 0.0, %v1544
    %1546 = vmatmul.bf16.gmra.mxu0 %v1414
    %v1547 = vpop.f32.mrf.mxu0
    %v1548 = vadd.f32 0.0, %v1547
    %v1549 = vpop.f32.mrf.mxu0
    %v1550 = vadd.f32 0.0, %v1549
    %1551 = vmatmul.bf16.gmra.mxu0 %v1415
    %v1552 = vpop.f32.mrf.mxu0
    %v1553 = vadd.f32 0.0, %v1552
    %v1554 = vpop.f32.mrf.mxu0
    %v1555 = vadd.f32 0.0, %v1554
    %1556 = vmatmul.bf16.gmra.mxu0 %v1416
    %v1557 = vpop.f32.mrf.mxu0
    %v1558 = vadd.f32 0.0, %v1557
    %v1559 = vpop.f32.mrf.mxu0
    %v1560 = vadd.f32 0.0, %v1559
    %1561 = vmatmul.bf16.gmra.mxu0 %v1417
    %v1562 = vpop.f32.mrf.mxu0
    %v1563 = vadd.f32 0.0, %v1562
    %v1564 = vpop.f32.mrf.mxu0
    %v1565 = vadd.f32 0.0, %v1564
    %1566 = vmatmul.bf16.gmra.mxu0 %v1418
    %v1567 = vpop.f32.mrf.mxu0
    %v1568 = vadd.f32 0.0, %v1567
    %v1569 = vpop.f32.mrf.mxu0
    %v1570 = vadd.f32 0.0, %v1569
    %1571 = vmatmul.bf16.gmra.mxu0 %v1419
    %v1572 = vpop.f32.mrf.mxu0
    %v1573 = vadd.f32 0.0, %v1572
    %v1574 = vpop.f32.mrf.mxu0
    %v1575 = vadd.f32 0.0, %v1574
    %1576 = vmatmul.bf16.gmra.mxu0 %v1420
    %v1577 = vpop.f32.mrf.mxu0
    %v1578 = vadd.f32 0.0, %v1577
    %v1579 = vpop.f32.mrf.mxu0
    %v1580 = vadd.f32 0.0, %v1579
    %1581 = vmatmul.bf16.gmra.mxu0 %v1421
    %v1582 = vpop.f32.mrf.mxu0
    %v1583 = vadd.f32 0.0, %v1582
    %v1584 = vpop.f32.mrf.mxu0
    %v1585 = vadd.f32 0.0, %v1584
    %1586 = vmatmul.bf16.gmra.mxu0 %v1422
    %v1587 = vpop.f32.mrf.mxu0
    %v1588 = vadd.f32 0.0, %v1587
    %v1589 = vpop.f32.mrf.mxu0
    %v1590 = vadd.f32 0.0, %v1589
    %1591 = vmatmul.bf16.gmra.mxu0 %v1423
    %v1592 = vpop.f32.mrf.mxu0
    %v1593 = vadd.f32 0.0, %v1592
    %v1594 = vpop.f32.mrf.mxu0
    %v1595 = vadd.f32 0.0, %v1594
    %1596 = vmatmul.bf16.gmra.mxu0 %v1424
    %v1597 = vpop.f32.mrf.mxu0
    %v1598 = vadd.f32 0.0, %v1597
    %v1599 = vpop.f32.mrf.mxu0
    %v1600 = vadd.f32 0.0, %v1599
    %1601 = vmatmul.bf16.gmra.mxu0 %v1425
    %v1602 = vpop.f32.mrf.mxu0
    %v1603 = vadd.f32 0.0, %v1602
    %v1604 = vpop.f32.mrf.mxu0
    %v1605 = vadd.f32 0.0, %v1604
    %1606 = vmatmul.bf16.gmra.mxu0 %v1426
    %v1607 = vpop.f32.mrf.mxu0
    %v1608 = vadd.f32 0.0, %v1607
    %v1609 = vpop.f32.mrf.mxu0
    %v1610 = vadd.f32 0.0, %v1609
    %1611 = vmatmul.bf16.gmra.mxu0 %v1427
    %v1612 = vpop.f32.mrf.mxu0
    %v1613 = vadd.f32 0.0, %v1612
    %v1614 = vpop.f32.mrf.mxu0
    %v1615 = vadd.f32 0.0, %v1614
    %1616 = vmatmul.bf16.gmra.mxu0 %v1428
    %v1617 = vpop.f32.mrf.mxu0
    %v1618 = vadd.f32 0.0, %v1617
    %v1619 = vpop.f32.mrf.mxu0
    %v1620 = vadd.f32 0.0, %v1619
    %1621 = vdwg.mxu0
    %v1622 = vpack.c.bf16 %v1505, %v1503
    %v1623 = vpack.c.bf16 %v1510, %v1508
    %v1624 = vpack.c.bf16 %v1515, %v1513
    %v1625 = vpack.c.bf16 %v1520, %v1518
    %v1626 = vpack.c.bf16 %v1525, %v1523
    %v1627 = vpack.c.bf16 %v1530, %v1528
    %v1628 = vpack.c.bf16 %v1535, %v1533
    %v1629 = vpack.c.bf16 %v1540, %v1538
    %v1630 = vpack.c.bf16 %v1545, %v1543
    %v1631 = vpack.c.bf16 %v1550, %v1548
    %v1632 = vpack.c.bf16 %v1555, %v1553
    %v1633 = vpack.c.bf16 %v1560, %v1558
    %v1634 = vpack.c.bf16 %v1565, %v1563
    %v1635 = vpack.c.bf16 %v1570, %v1568
    %v1636 = vpack.c.bf16 %v1575, %v1573
    %v1637 = vpack.c.bf16 %v1580, %v1578
    %v1638 = vpack.c.bf16 %v1585, %v1583
    %v1639 = vpack.c.bf16 %v1590, %v1588
    %v1640 = vpack.c.bf16 %v1595, %v1593
    %v1641 = vpack.c.bf16 %v1600, %v1598
    %v1642 = vpack.c.bf16 %v1605, %v1603
    %v1643 = vpack.c.bf16 %v1610, %v1608
    %v1644 = vpack.c.bf16 %v1615, %v1613
    %v1645 = vpack.c.bf16 %v1620, %v1618
    %1646 = vmatpush.bf16.msra.mxu0 %v1629
    %1647 = vmatpush.bf16.msra.mxu0 %v1628
    %1648 = vmatpush.bf16.msra.mxu0 %v1627
    %1649 = vmatpush.bf16.msra.mxu0 %v1626
    %1650 = vmatpush.bf16.msra.mxu0 %v1625
    %1651 = vmatpush.bf16.msra.mxu0 %v1624
    %1652 = vmatpush.bf16.msra.mxu0 %v1623
    %1653 = vmatpush.bf16.msra.mxu0 %v1622
    %1654 = vmatmul.bf16.gmra.mxu0 %v826
    %v1655 = vpop.f32.mrf.mxu0
    %v1656 = vadd.f32 0.0, %v1655
    %v1657 = vpop.f32.mrf.mxu0
    %v1658 = vadd.f32 0.0, %v1657
    %1659 = vmatmul.bf16.gmra.mxu0 %v829
    %v1660 = vpop.f32.mrf.mxu0
    %v1661 = vadd.f32 0.0, %v1660
    %v1662 = vpop.f32.mrf.mxu0
    %v1663 = vadd.f32 0.0, %v1662
    %1664 = vmatmul.bf16.gmra.mxu0 %v832
    %v1665 = vpop.f32.mrf.mxu0
    %v1666 = vadd.f32 0.0, %v1665
    %v1667 = vpop.f32.mrf.mxu0
    %v1668 = vadd.f32 0.0, %v1667
    %1669 = vmatmul.bf16.gmra.mxu0 %v835
    %v1670 = vpop.f32.mrf.mxu0
    %v1671 = vadd.f32 0.0, %v1670
    %v1672 = vpop.f32.mrf.mxu0
    %v1673 = vadd.f32 0.0, %v1672
    %1674 = vmatmul.bf16.gmra.mxu0 %v838
    %v1675 = vpop.f32.mrf.mxu0
    %v1676 = vadd.f32 0.0, %v1675
    %v1677 = vpop.f32.mrf.mxu0
    %v1678 = vadd.f32 0.0, %v1677
    %1679 = vmatmul.bf16.gmra.mxu0 %v841
    %v1680 = vpop.f32.mrf.mxu0
    %v1681 = vadd.f32 0.0, %v1680
    %v1682 = vpop.f32.mrf.mxu0
    %v1683 = vadd.f32 0.0, %v1682
    %1684 = vmatmul.bf16.gmra.mxu0 %v844
    %v1685 = vpop.f32.mrf.mxu0
    %v1686 = vadd.f32 0.0, %v1685
    %v1687 = vpop.f32.mrf.mxu0
    %v1688 = vadd.f32 0.0, %v1687
    %1689 = vmatmul.bf16.gmra.mxu0 %v847
    %v1690 = vpop.f32.mrf.mxu0
    %v1691 = vadd.f32 0.0, %v1690
    %v1692 = vpop.f32.mrf.mxu0
    %v1693 = vadd.f32 0.0, %v1692
    %1694 = vmatmul.bf16.gmra.mxu0 %v850
    %v1695 = vpop.f32.mrf.mxu0
    %v1696 = vadd.f32 0.0, %v1695
    %v1697 = vpop.f32.mrf.mxu0
    %v1698 = vadd.f32 0.0, %v1697
    %1699 = vmatmul.bf16.gmra.mxu0 %v853
    %v1700 = vpop.f32.mrf.mxu0
    %v1701 = vadd.f32 0.0, %v1700
    %v1702 = vpop.f32.mrf.mxu0
    %v1703 = vadd.f32 0.0, %v1702
    %1704 = vmatmul.bf16.gmra.mxu0 %v856
    %v1705 = vpop.f32.mrf.mxu0
    %v1706 = vadd.f32 0.0, %v1705
    %v1707 = vpop.f32.mrf.mxu0
    %v1708 = vadd.f32 0.0, %v1707
    %1709 = vmatmul.bf16.gmra.mxu0 %v859
    %v1710 = vpop.f32.mrf.mxu0
    %v1711 = vadd.f32 0.0, %v1710
    %v1712 = vpop.f32.mrf.mxu0
    %v1713 = vadd.f32 0.0, %v1712
    %1714 = vmatmul.bf16.gmra.mxu0 %v862
    %v1715 = vpop.f32.mrf.mxu0
    %v1716 = vadd.f32 0.0, %v1715
    %v1717 = vpop.f32.mrf.mxu0
    %v1718 = vadd.f32 0.0, %v1717
    %1719 = vmatmul.bf16.gmra.mxu0 %v865
    %v1720 = vpop.f32.mrf.mxu0
    %v1721 = vadd.f32 0.0, %v1720
    %v1722 = vpop.f32.mrf.mxu0
    %v1723 = vadd.f32 0.0, %v1722
    %1724 = vmatmul.bf16.gmra.mxu0 %v868
    %v1725 = vpop.f32.mrf.mxu0
    %v1726 = vadd.f32 0.0, %v1725
    %v1727 = vpop.f32.mrf.mxu0
    %v1728 = vadd.f32 0.0, %v1727
    %1729 = vmatmul.bf16.gmra.mxu0 %v871
    %v1730 = vpop.f32.mrf.mxu0
    %v1731 = vadd.f32 0.0, %v1730
    %v1732 = vpop.f32.mrf.mxu0
    %v1733 = vadd.f32 0.0, %v1732
    %1734 = vmatmul.bf16.gmra.mxu0 %v874
    %v1735 = vpop.f32.mrf.mxu0
    %v1736 = vadd.f32 0.0, %v1735
    %v1737 = vpop.f32.mrf.mxu0
    %v1738 = vadd.f32 0.0, %v1737
    %1739 = vmatmul.bf16.gmra.mxu0 %v877
    %v1740 = vpop.f32.mrf.mxu0
    %v1741 = vadd.f32 0.0, %v1740
    %v1742 = vpop.f32.mrf.mxu0
    %v1743 = vadd.f32 0.0, %v1742
    %1744 = vmatmul.bf16.gmra.mxu0 %v880
    %v1745 = vpop.f32.mrf.mxu0
    %v1746 = vadd.f32 0.0, %v1745
    %v1747 = vpop.f32.mrf.mxu0
    %v1748 = vadd.f32 0.0, %v1747
    %1749 = vmatmul.bf16.gmra.mxu0 %v883
    %v1750 = vpop.f32.mrf.mxu0
    %v1751 = vadd.f32 0.0, %v1750
    %v1752 = vpop.f32.mrf.mxu0
    %v1753 = vadd.f32 0.0, %v1752
    %1754 = vmatmul.bf16.gmra.mxu0 %v886
    %v1755 = vpop.f32.mrf.mxu0
    %v1756 = vadd.f32 0.0, %v1755
    %v1757 = vpop.f32.mrf.mxu0
    %v1758 = vadd.f32 0.0, %v1757
    %1759 = vmatmul.bf16.gmra.mxu0 %v889
    %v1760 = vpop.f32.mrf.mxu0
    %v1761 = vadd.f32 0.0, %v1760
    %v1762 = vpop.f32.mrf.mxu0
    %v1763 = vadd.f32 0.0, %v1762
    %1764 = vmatmul.bf16.gmra.mxu0 %v892
    %v1765 = vpop.f32.mrf.mxu0
    %v1766 = vadd.f32 0.0, %v1765
    %v1767 = vpop.f32.mrf.mxu0
    %v1768 = vadd.f32 0.0, %v1767
    %1769 = vmatmul.bf16.gmra.mxu0 %v895
    %v1770 = vpop.f32.mrf.mxu0
    %v1771 = vadd.f32 0.0, %v1770
    %v1772 = vpop.f32.mrf.mxu0
    %v1773 = vadd.f32 0.0, %v1772
    %1774 = vdwg.mxu0
    %1775 = vmatpush.bf16.msra.mxu0 %v1637
    %1776 = vmatpush.bf16.msra.mxu0 %v1636
    %1777 = vmatpush.bf16.msra.mxu0 %v1635
    %1778 = vmatpush.bf16.msra.mxu0 %v1634
    %1779 = vmatpush.bf16.msra.mxu0 %v1633
    %1780 = vmatpush.bf16.msra.mxu0 %v1632
    %1781 = vmatpush.bf16.msra.mxu0 %v1631
    %1782 = vmatpush.bf16.msra.mxu0 %v1630
    %1783 = vmatmul.bf16.gmra.mxu0 %v827
    %v1784 = vpop.f32.mrf.mxu0
    %v1785 = vadd.f32 %v1656, %v1784
    %v1786 = vpop.f32.mrf.mxu0
    %v1787 = vadd.f32 %v1658, %v1786
    %1788 = vmatmul.bf16.gmra.mxu0 %v830
    %v1789 = vpop.f32.mrf.mxu0
    %v1790 = vadd.f32 %v1661, %v1789
    %v1791 = vpop.f32.mrf.mxu0
    %v1792 = vadd.f32 %v1663, %v1791
    %1793 = vmatmul.bf16.gmra.mxu0 %v833
    %v1794 = vpop.f32.mrf.mxu0
    %v1795 = vadd.f32 %v1666, %v1794
    %v1796 = vpop.f32.mrf.mxu0
    %v1797 = vadd.f32 %v1668, %v1796
    %1798 = vmatmul.bf16.gmra.mxu0 %v836
    %v1799 = vpop.f32.mrf.mxu0
    %v1800 = vadd.f32 %v1671, %v1799
    %v1801 = vpop.f32.mrf.mxu0
    %v1802 = vadd.f32 %v1673, %v1801
    %1803 = vmatmul.bf16.gmra.mxu0 %v839
    %v1804 = vpop.f32.mrf.mxu0
    %v1805 = vadd.f32 %v1676, %v1804
    %v1806 = vpop.f32.mrf.mxu0
    %v1807 = vadd.f32 %v1678, %v1806
    %1808 = vmatmul.bf16.gmra.mxu0 %v842
    %v1809 = vpop.f32.mrf.mxu0
    %v1810 = vadd.f32 %v1681, %v1809
    %v1811 = vpop.f32.mrf.mxu0
    %v1812 = vadd.f32 %v1683, %v1811
    %1813 = vmatmul.bf16.gmra.mxu0 %v845
    %v1814 = vpop.f32.mrf.mxu0
    %v1815 = vadd.f32 %v1686, %v1814
    %v1816 = vpop.f32.mrf.mxu0
    %v1817 = vadd.f32 %v1688, %v1816
    %1818 = vmatmul.bf16.gmra.mxu0 %v848
    %v1819 = vpop.f32.mrf.mxu0
    %v1820 = vadd.f32 %v1691, %v1819
    %v1821 = vpop.f32.mrf.mxu0
    %v1822 = vadd.f32 %v1693, %v1821
    %1823 = vmatmul.bf16.gmra.mxu0 %v851
    %v1824 = vpop.f32.mrf.mxu0
    %v1825 = vadd.f32 %v1696, %v1824
    %v1826 = vpop.f32.mrf.mxu0
    %v1827 = vadd.f32 %v1698, %v1826
    %1828 = vmatmul.bf16.gmra.mxu0 %v854
    %v1829 = vpop.f32.mrf.mxu0
    %v1830 = vadd.f32 %v1701, %v1829
    %v1831 = vpop.f32.mrf.mxu0
    %v1832 = vadd.f32 %v1703, %v1831
    %1833 = vmatmul.bf16.gmra.mxu0 %v857
    %v1834 = vpop.f32.mrf.mxu0
    %v1835 = vadd.f32 %v1706, %v1834
    %v1836 = vpop.f32.mrf.mxu0
    %v1837 = vadd.f32 %v1708, %v1836
    %1838 = vmatmul.bf16.gmra.mxu0 %v860
    %v1839 = vpop.f32.mrf.mxu0
    %v1840 = vadd.f32 %v1711, %v1839
    %v1841 = vpop.f32.mrf.mxu0
    %v1842 = vadd.f32 %v1713, %v1841
    %1843 = vmatmul.bf16.gmra.mxu0 %v863
    %v1844 = vpop.f32.mrf.mxu0
    %v1845 = vadd.f32 %v1716, %v1844
    %v1846 = vpop.f32.mrf.mxu0
    %v1847 = vadd.f32 %v1718, %v1846
    %1848 = vmatmul.bf16.gmra.mxu0 %v866
    %v1849 = vpop.f32.mrf.mxu0
    %v1850 = vadd.f32 %v1721, %v1849
    %v1851 = vpop.f32.mrf.mxu0
    %v1852 = vadd.f32 %v1723, %v1851
    %1853 = vmatmul.bf16.gmra.mxu0 %v869
    %v1854 = vpop.f32.mrf.mxu0
    %v1855 = vadd.f32 %v1726, %v1854
    %v1856 = vpop.f32.mrf.mxu0
    %v1857 = vadd.f32 %v1728, %v1856
    %1858 = vmatmul.bf16.gmra.mxu0 %v872
    %v1859 = vpop.f32.mrf.mxu0
    %v1860 = vadd.f32 %v1731, %v1859
    %v1861 = vpop.f32.mrf.mxu0
    %v1862 = vadd.f32 %v1733, %v1861
    %1863 = vmatmul.bf16.gmra.mxu0 %v875
    %v1864 = vpop.f32.mrf.mxu0
    %v1865 = vadd.f32 %v1736, %v1864
    %v1866 = vpop.f32.mrf.mxu0
    %v1867 = vadd.f32 %v1738, %v1866
    %1868 = vmatmul.bf16.gmra.mxu0 %v878
    %v1869 = vpop.f32.mrf.mxu0
    %v1870 = vadd.f32 %v1741, %v1869
    %v1871 = vpop.f32.mrf.mxu0
    %v1872 = vadd.f32 %v1743, %v1871
    %1873 = vmatmul.bf16.gmra.mxu0 %v881
    %v1874 = vpop.f32.mrf.mxu0
    %v1875 = vadd.f32 %v1746, %v1874
    %v1876 = vpop.f32.mrf.mxu0
    %v1877 = vadd.f32 %v1748, %v1876
    %1878 = vmatmul.bf16.gmra.mxu0 %v884
    %v1879 = vpop.f32.mrf.mxu0
    %v1880 = vadd.f32 %v1751, %v1879
    %v1881 = vpop.f32.mrf.mxu0
    %v1882 = vadd.f32 %v1753, %v1881
    %1883 = vmatmul.bf16.gmra.mxu0 %v887
    %v1884 = vpop.f32.mrf.mxu0
    %v1885 = vadd.f32 %v1756, %v1884
    %v1886 = vpop.f32.mrf.mxu0
    %v1887 = vadd.f32 %v1758, %v1886
    %1888 = vmatmul.bf16.gmra.mxu0 %v890
    %v1889 = vpop.f32.mrf.mxu0
    %v1890 = vadd.f32 %v1761, %v1889
    %v1891 = vpop.f32.mrf.mxu0
    %v1892 = vadd.f32 %v1763, %v1891
    %1893 = vmatmul.bf16.gmra.mxu0 %v893
    %v1894 = vpop.f32.mrf.mxu0
    %v1895 = vadd.f32 %v1766, %v1894
    %v1896 = vpop.f32.mrf.mxu0
    %v1897 = vadd.f32 %v1768, %v1896
    %1898 = vmatmul.bf16.gmra.mxu0 %v896
    %v1899 = vpop.f32.mrf.mxu0
    %v1900 = vadd.f32 %v1771, %v1899
    %v1901 = vpop.f32.mrf.mxu0
    %v1902 = vadd.f32 %v1773, %v1901
    %1903 = vdwg.mxu0
    %1904 = vmatpush.bf16.msra.mxu0 %v1645
    %1905 = vmatpush.bf16.msra.mxu0 %v1644
    %1906 = vmatpush.bf16.msra.mxu0 %v1643
    %1907 = vmatpush.bf16.msra.mxu0 %v1642
    %1908 = vmatpush.bf16.msra.mxu0 %v1641
    %1909 = vmatpush.bf16.msra.mxu0 %v1640
    %1910 = vmatpush.bf16.msra.mxu0 %v1639
    %1911 = vmatpush.bf16.msra.mxu0 %v1638
    %1912 = vmatmul.bf16.gmra.mxu0 %v828
    %v1913 = vpop.f32.mrf.mxu0
    %v1914 = vadd.f32 %v1785, %v1913
    %v1915 = vpop.f32.mrf.mxu0
    %v1916 = vadd.f32 %v1787, %v1915
    %1917 = vmatmul.bf16.gmra.mxu0 %v831
    %v1918 = vpop.f32.mrf.mxu0
    %v1919 = vadd.f32 %v1790, %v1918
    %v1920 = vpop.f32.mrf.mxu0
    %v1921 = vadd.f32 %v1792, %v1920
    %1922 = vmatmul.bf16.gmra.mxu0 %v834
    %v1923 = vpop.f32.mrf.mxu0
    %v1924 = vadd.f32 %v1795, %v1923
    %v1925 = vpop.f32.mrf.mxu0
    %v1926 = vadd.f32 %v1797, %v1925
    %1927 = vmatmul.bf16.gmra.mxu0 %v837
    %v1928 = vpop.f32.mrf.mxu0
    %v1929 = vadd.f32 %v1800, %v1928
    %v1930 = vpop.f32.mrf.mxu0
    %v1931 = vadd.f32 %v1802, %v1930
    %1932 = vmatmul.bf16.gmra.mxu0 %v840
    %v1933 = vpop.f32.mrf.mxu0
    %v1934 = vadd.f32 %v1805, %v1933
    %v1935 = vpop.f32.mrf.mxu0
    %v1936 = vadd.f32 %v1807, %v1935
    %1937 = vmatmul.bf16.gmra.mxu0 %v843
    %v1938 = vpop.f32.mrf.mxu0
    %v1939 = vadd.f32 %v1810, %v1938
    %v1940 = vpop.f32.mrf.mxu0
    %v1941 = vadd.f32 %v1812, %v1940
    %1942 = vmatmul.bf16.gmra.mxu0 %v846
    %v1943 = vpop.f32.mrf.mxu0
    %v1944 = vadd.f32 %v1815, %v1943
    %v1945 = vpop.f32.mrf.mxu0
    %v1946 = vadd.f32 %v1817, %v1945
    %1947 = vmatmul.bf16.gmra.mxu0 %v849
    %v1948 = vpop.f32.mrf.mxu0
    %v1949 = vadd.f32 %v1820, %v1948
    %v1950 = vpop.f32.mrf.mxu0
    %v1951 = vadd.f32 %v1822, %v1950
    %1952 = vmatmul.bf16.gmra.mxu0 %v852
    %v1953 = vpop.f32.mrf.mxu0
    %v1954 = vadd.f32 %v1825, %v1953
    %v1955 = vpop.f32.mrf.mxu0
    %v1956 = vadd.f32 %v1827, %v1955
    %1957 = vmatmul.bf16.gmra.mxu0 %v855
    %v1958 = vpop.f32.mrf.mxu0
    %v1959 = vadd.f32 %v1830, %v1958
    %v1960 = vpop.f32.mrf.mxu0
    %v1961 = vadd.f32 %v1832, %v1960
    %1962 = vmatmul.bf16.gmra.mxu0 %v858
    %v1963 = vpop.f32.mrf.mxu0
    %v1964 = vadd.f32 %v1835, %v1963
    %v1965 = vpop.f32.mrf.mxu0
    %v1966 = vadd.f32 %v1837, %v1965
    %1967 = vmatmul.bf16.gmra.mxu0 %v861
    %v1968 = vpop.f32.mrf.mxu0
    %v1969 = vadd.f32 %v1840, %v1968
    %v1970 = vpop.f32.mrf.mxu0
    %v1971 = vadd.f32 %v1842, %v1970
    %1972 = vmatmul.bf16.gmra.mxu0 %v864
    %v1973 = vpop.f32.mrf.mxu0
    %v1974 = vadd.f32 %v1845, %v1973
    %v1975 = vpop.f32.mrf.mxu0
    %v1976 = vadd.f32 %v1847, %v1975
    %1977 = vmatmul.bf16.gmra.mxu0 %v867
    %v1978 = vpop.f32.mrf.mxu0
    %v1979 = vadd.f32 %v1850, %v1978
    %v1980 = vpop.f32.mrf.mxu0
    %v1981 = vadd.f32 %v1852, %v1980
    %1982 = vmatmul.bf16.gmra.mxu0 %v870
    %v1983 = vpop.f32.mrf.mxu0
    %v1984 = vadd.f32 %v1855, %v1983
    %v1985 = vpop.f32.mrf.mxu0
    %v1986 = vadd.f32 %v1857, %v1985
    %1987 = vmatmul.bf16.gmra.mxu0 %v873
    %v1988 = vpop.f32.mrf.mxu0
    %v1989 = vadd.f32 %v1860, %v1988
    %v1990 = vpop.f32.mrf.mxu0
    %v1991 = vadd.f32 %v1862, %v1990
    %1992 = vmatmul.bf16.gmra.mxu0 %v876
    %v1993 = vpop.f32.mrf.mxu0
    %v1994 = vadd.f32 %v1865, %v1993
    %v1995 = vpop.f32.mrf.mxu0
    %v1996 = vadd.f32 %v1867, %v1995
    %1997 = vmatmul.bf16.gmra.mxu0 %v879
    %v1998 = vpop.f32.mrf.mxu0
    %v1999 = vadd.f32 %v1870, %v1998
    %v2000 = vpop.f32.mrf.mxu0
    %v2001 = vadd.f32 %v1872, %v2000
    %2002 = vmatmul.bf16.gmra.mxu0 %v882
    %v2003 = vpop.f32.mrf.mxu0
    %v2004 = vadd.f32 %v1875, %v2003
    %v2005 = vpop.f32.mrf.mxu0
    %v2006 = vadd.f32 %v1877, %v2005
    %2007 = vmatmul.bf16.gmra.mxu0 %v885
    %v2008 = vpop.f32.mrf.mxu0
    %v2009 = vadd.f32 %v1880, %v2008
    %v2010 = vpop.f32.mrf.mxu0
    %v2011 = vadd.f32 %v1882, %v2010
    %2012 = vmatmul.bf16.gmra.mxu0 %v888
    %v2013 = vpop.f32.mrf.mxu0
    %v2014 = vadd.f32 %v1885, %v2013
    %v2015 = vpop.f32.mrf.mxu0
    %v2016 = vadd.f32 %v1887, %v2015
    %2017 = vmatmul.bf16.gmra.mxu0 %v891
    %v2018 = vpop.f32.mrf.mxu0
    %v2019 = vadd.f32 %v1890, %v2018
    %v2020 = vpop.f32.mrf.mxu0
    %v2021 = vadd.f32 %v1892, %v2020
    %2022 = vmatmul.bf16.gmra.mxu0 %v894
    %v2023 = vpop.f32.mrf.mxu0
    %v2024 = vadd.f32 %v1895, %v2023
    %v2025 = vpop.f32.mrf.mxu0
    %v2026 = vadd.f32 %v1897, %v2025
    %2027 = vmatmul.bf16.gmra.mxu0 %v897
    %v2028 = vpop.f32.mrf.mxu0
    %v2029 = vadd.f32 %v1900, %v2028
    %v2030 = vpop.f32.mrf.mxu0
    %v2031 = vadd.f32 %v1902, %v2030
    %2032 = vdwg.mxu0
    %2033 = vst [vmem:[#allocation10] sm:$0xff] %v1914
    %2034 = vst [vmem:[#allocation10 + $0x8] sm:$0xff] %v1916
    %2035 = vst [vmem:[#allocation10 + $0x10] sm:$0xff] %v1919
    %2036 = vst [vmem:[#allocation10 + $0x18] sm:$0xff] %v1921
    %2037 = vst [vmem:[#allocation10 + $0x20] sm:$0xff] %v1924
    %2038 = vst [vmem:[#allocation10 + $0x28] sm:$0xff] %v1926
    %2039 = vst [vmem:[#allocation10 + $0x30] sm:$0xff] %v1929
    %2040 = vst [vmem:[#allocation10 + $0x38] sm:$0xff] %v1931
    %2041 = vst [vmem:[#allocation10 + $0x40] sm:$0xff] %v1934
    %2042 = vst [vmem:[#allocation10 + $0x48] sm:$0xff] %v1936
    %2043 = vst [vmem:[#allocation10 + $0x50] sm:$0xff] %v1939
    %2044 = vst [vmem:[#allocation10 + $0x58] sm:$0xff] %v1941
    %2045 = vst [vmem:[#allocation10 + $0x60] sm:$0xff] %v1944
    %2046 = vst [vmem:[#allocation10 + $0x68] sm:$0xff] %v1946
    %2047 = vst [vmem:[#allocation10 + $0x70] sm:$0xff] %v1949
    %2048 = vst [vmem:[#allocation10 + $0x78] sm:$0xff] %v1951
    %2049 = vst [vmem:[#allocation10 + $0x80] sm:$0xff] %v1954
    %2050 = vst [vmem:[#allocation10 + $0x88] sm:$0xff] %v1956
    %2051 = vst [vmem:[#allocation10 + $0x90] sm:$0xff] %v1959
    %2052 = vst [vmem:[#allocation10 + $0x98] sm:$0xff] %v1961
    %2053 = vst [vmem:[#allocation10 + $0xa0] sm:$0xff] %v1964
    %2054 = vst [vmem:[#allocation10 + $0xa8] sm:$0xff] %v1966
    %2055 = vst [vmem:[#allocation10 + $0xb0] sm:$0xff] %v1969
    %2056 = vst [vmem:[#allocation10 + $0xb8] sm:$0xff] %v1971
    %2057 = vst [vmem:[#allocation10 + $0xc0] sm:$0xff] %v1974
    %2058 = vst [vmem:[#allocation10 + $0xc8] sm:$0xff] %v1976
    %2059 = vst [vmem:[#allocation10 + $0xd0] sm:$0xff] %v1979
    %2060 = vst [vmem:[#allocation10 + $0xd8] sm:$0xff] %v1981
    %2061 = vst [vmem:[#allocation10 + $0xe0] sm:$0xff] %v1984
    %2062 = vst [vmem:[#allocation10 + $0xe8] sm:$0xff] %v1986
    %2063 = vst [vmem:[#allocation10 + $0xf0] sm:$0xff] %v1989
    %2064 = vst [vmem:[#allocation10 + $0xf8] sm:$0xff] %v1991
    %2065 = vst [vmem:[#allocation10 + $0x100] sm:$0xff] %v1994
    %2066 = vst [vmem:[#allocation10 + $0x108] sm:$0xff] %v1996
    %2067 = vst [vmem:[#allocation10 + $0x110] sm:$0xff] %v1999
    %2068 = vst [vmem:[#allocation10 + $0x118] sm:$0xff] %v2001
    %2069 = vst [vmem:[#allocation10 + $0x120] sm:$0xff] %v2004
    %2070 = vst [vmem:[#allocation10 + $0x128] sm:$0xff] %v2006
    %2071 = vst [vmem:[#allocation10 + $0x130] sm:$0xff] %v2009
    %2072 = vst [vmem:[#allocation10 + $0x138] sm:$0xff] %v2011
    %2073 = vst [vmem:[#allocation10 + $0x140] sm:$0xff] %v2014
    %2074 = vst [vmem:[#allocation10 + $0x148] sm:$0xff] %v2016
    %2075 = vst [vmem:[#allocation10 + $0x150] sm:$0xff] %v2019
    %2076 = vst [vmem:[#allocation10 + $0x158] sm:$0xff] %v2021
    %2077 = vst [vmem:[#allocation10 + $0x160] sm:$0xff] %v2024
    %2078 = vst [vmem:[#allocation10 + $0x168] sm:$0xff] %v2026
    %2079 = vst [vmem:[#allocation10 + $0x170] sm:$0xff] %v2029
    %2080 = vst [vmem:[#allocation10 + $0x178] sm:$0xff] %v2031
    // Predicated region
    $region34: #{tpu_custom_call.1} parent=1 // pred_check
      _
    $region35: #{tpu_custom_call.1} parent=1 // pred_check_branch
      %2082 = sbr.rel (0) target = $region37
    $region36: #{tpu_custom_call.1} parent=1 // pred_region
      %2084 = vsyncadd [#allocation4], 0
      %s2085 = sshll.u32 [#allocation10], 4
      %s2086 = int_to_ptr.vmem [resolvable:$true] %s2085
      %s2087 = sshll.u32 %s4, 4
      %s2088 = int_to_ptr.hbm [resolvable:$true] %s2087
      %2093 = dma.vmem_to_hbm [thread:$0]  %s2086, 6144, %s2088, [#allocation4], 128, 128, 8
    $region37: #{tpu_custom_call.1} parent=1 // pred_fallthru
      _
    // Predicated region
    $region38: #{tpu_custom_call.1} parent=1 // pred_check
      _
    $region39: #{tpu_custom_call.1} parent=1 // pred_check_branch
      %2095 = sbr.rel (0) target = $region41
    $region40: #{tpu_custom_call.1} parent=1 // pred_region
      %2097 = dma.done [#allocation4], 6144
    $region41: #{tpu_custom_call.1} parent=1 // pred_fallthru
      _
    %2098 = vsyncpa [#allocation3], 1
    %2099 = vsyncpa [#allocation6], 1
    %2100 = vsyncpa [#allocation9], 1
    %2101 = vsyncpa [#allocation4], 1

</llo_original>
